<compile_context>
chip_gen: v7x
topology: tpu7x:2x2x1
jax: 0.10.0
libtpu: 0.0.40
codegen_flags: <defaults>
</compile_context>

<pallas_src>
import functools

import jax
import jax.numpy as jnp
from jax.experimental import pallas as pl
from jax.experimental.pallas import tpu as pltpu


# -----------------------------------------------------------------------------
# Shared forward math.  Used by the Pallas kernel (on VMEM-loaded values) AND by
# the pure-JAX references (on arrays), so the kernel semantics are checked
# against bit-identical math.
#
# Packed parameter layout: one (2H+8, 3H) slab per "module", stacked on axis 0.
#   slab 0 / 1 (GRU layer 1 / 2):
#     rows [0:in_dim)   W_ih^T, gate-concatenated along lanes [r | z | n]
#     rows [H:2H)       W_hh^T, gate-concatenated along lanes [r | z | n]
#     row  2H           b_gi = [b_ir+b_hr | b_iz+b_hz | b_in]
#     row  2H+1         b_gh = [0 | 0 | b_hn]   (kept inside r*(...), torch GRU)
#   slab 2 (FC head):
#     rows [0:H), lanes [0:C)  fc_w^T ;  row H, lanes [0:C)  fc_b
# -----------------------------------------------------------------------------
def _forward_math(x, p_all, num_classes, precision=None):
    f32 = jnp.float32
    cdt = p_all.dtype                       # dtype of the MXU operands (bf16)
    B, S, I = x.shape
    H = p_all.shape[-1] // 3

    # Free flatten (row b*S + t) + one cast to the matmul operand dtype.
    x2 = x.reshape(B * S, I).astype(cdt)
    if I < H:                               # zero-pad K to H so every dot is aligned
        x2 = jnp.concatenate([x2, jnp.zeros((B * S, H - I), cdt)], axis=1)

    def dot(a, b):
        return jnp.dot(a, b, preferred_element_type=f32, precision=precision)

    def gru_layer(x_c, p, time_major):
        # x_c: (B*S, H) in `cdt`; rows are b*S+t (batch-major) or t*B+b (time-major)
        w_ih = p[0:H, :]                                   # (H, 3H)
        w_hh = p[H:2 * H, :]                               # (H, 3H) loop-invariant RHS
        b_gi = p[2 * H:2 * H + 1, :].astype(f32)           # (1, 3H)
        b_gh = p[2 * H + 1:2 * H + 2, :].astype(f32)       # (1, 3H)

        # Hoisted input projection for ALL timesteps: one MXU matmul per layer.
        gi = dot(x_c, w_ih) + b_gi                         # (B*S, 3H) f32

        def gi_at(t):
            if time_major:
                return gi[t * B:(t + 1) * B, :]
            return jnp.concatenate(
                [gi[b * S + t:b * S + t + 1, :] for b in range(B)], axis=0)

        h = jnp.zeros((B, H), f32)
        hs = []
        for t in range(S):                                 # fully unrolled recurrence
            gi_t = gi_at(t)                                # (B, 3H)
            gh = dot(h.astype(cdt), w_hh) + b_gh           # ONE matmul per step
            rz = jax.nn.sigmoid(gi_t[:, :2 * H] + gh[:, :2 * H])   # joint r|z
            r = rz[:, :H]
            z = rz[:, H:]
            n = jnp.tanh(gi_t[:, 2 * H:] + r * gh[:, 2 * H:])
            h = (1.0 - z) * n + z * h
            hs.append(h)
        return h, hs

    # Layer 1 consumes batch-major x; its outputs are stacked time-major so
    # layer 2's hoisted projection and per-step reads are contiguous slices.
    _, hs1 = gru_layer(x2, p_all[0], time_major=False)
    h1_all = jnp.concatenate(hs1, axis=0).astype(cdt)       # (S*B, H)
    h2, _ = gru_layer(h1_all, p_all[1], time_major=True)

    p_fc = p_all[2]
    logits = dot(h2.astype(cdt), p_fc[0:H, :]) + p_fc[H:H + 1, :].astype(f32)
    return logits[:, :num_classes]


# ------------------------------- Pallas kernel --------------------------------
def _fused_gru_fc_kernel(x_ref, p_ref, out_ref):
    out = _forward_math(x_ref[...], p_ref[...], out_ref.shape[1])
    out_ref[...] = out.astype(out_ref.dtype)


@functools.partial(jax.jit, static_argnames=("num_classes",))
def my_gru_forward(x, packed, num_classes=10):
    """x: (B, S, input_size) float32 (batch_first, like PyTorch). Returns (B, C)."""
    B, S, I = x.shape
    H = packed.shape[-1] // 3
    assert packed.shape[0] == 3, "packed buffer = 2 GRU layers + FC head"
    assert I <= H, "W_ih is packed into the H-row block (requires input_size <= hidden)"

    flops = int(4 * (2 * B * S * H * 3 * H) + 2 * B * H * num_classes)
    transcendentals = int(2 * B * S * 3 * H)
    bytes_accessed = int(x.size * x.dtype.itemsize
                         + packed.size * packed.dtype.itemsize
                         + B * num_classes * 4)

    vmem = pl.BlockSpec(memory_space=pltpu.MemorySpace.VMEM)
    return pl.pallas_call(
        _fused_gru_fc_kernel,
        out_shape=jax.ShapeDtypeStruct((B, num_classes), jnp.float32),
        in_specs=[vmem, vmem],
        out_specs=vmem,
        cost_estimate=pl.CostEstimate(flops=flops,
                                      transcendentals=transcendentals,
                                      bytes_accessed=bytes_accessed),
    )(x, packed)


# ------------------------- parameters & host-side packing ---------------------
def init_params(key, input_size, hidden_size, num_layers, num_classes=10):
    """Random parameters in torch.nn.GRU / nn.Linear layout (gate order r, z, n)."""
    H = hidden_size
    params = {"gru": []}
    in_dim = input_size
    for _ in range(num_layers):
        key, k1, k2, k3, k4 = jax.random.split(key, 5)
        params["gru"].append({
            "w_ih": jax.random.normal(k1, (3 * H, in_dim), jnp.float32) * 0.1,
            "w_hh": jax.random.normal(k2, (3 * H, H), jnp.float32) * 0.1,
            "b_ih": jax.random.normal(k3, (3 * H,), jnp.float32) * 0.1,
            "b_hh": jax.random.normal(k4, (3 * H,), jnp.float32) * 0.1,
        })
        in_dim = H
    key, k5, k6 = jax.random.split(key, 3)
    params["fc_w"] = jax.random.normal(k5, (num_classes, H), jnp.float32) * 0.02
    params["fc_b"] = jax.random.normal(k6, (num_classes,), jnp.float32) * 0.02
    return params


def pack_params(params, dtype=jnp.bfloat16):
    """Pack everything into one (num_layers+1, 2H+8, 3H) buffer (layout above)."""
    H = params["gru"][0]["w_hh"].shape[1]
    C = params["fc_w"].shape[0]
    G, R = 3 * H, 2 * H + 8
    slabs = []
    for layer in params["gru"]:
        w_ih, w_hh = layer["w_ih"], layer["w_hh"]
        b_ih, b_hh = layer["b_ih"], layer["b_hh"]
        in_dim = w_ih.shape[1]
        w_ih_cat = jnp.concatenate([w_ih[g * H:(g + 1) * H, :].T for g in range(3)], axis=1)
        w_hh_cat = jnp.concatenate([w_hh[g * H:(g + 1) * H, :].T for g in range(3)], axis=1)
        b_gi = jnp.concatenate([b_ih[0:H] + b_hh[0:H],
                                b_ih[H:2 * H] + b_hh[H:2 * H],
                                b_ih[2 * H:]])
        b_gh = jnp.concatenate([jnp.zeros((2 * H,), jnp.float32), b_hh[2 * H:]])
        slab = jnp.zeros((R, G), jnp.float32)
        slab = slab.at[0:in_dim, :].set(w_ih_cat)
        slab = slab.at[H:2 * H, :].set(w_hh_cat)
        slab = slab.at[2 * H, :].set(b_gi)
        slab = slab.at[2 * H + 1, :].set(b_gh)
        slabs.append(slab)
    fc = jnp.zeros((R, G), jnp.float32)
    fc = fc.at[0:H, 0:C].set(params["fc_w"].T)
    fc = fc.at[H, 0:C].set(params["fc_b"])
    slabs.append(fc)
    return jnp.stack(slabs, axis=0).astype(dtype)


# --------------------- pure-JAX float32 (torch-style) reference ---------------
def gru_reference(x, params):
    hp = jax.lax.Precision.HIGHEST
    B, S, _ = x.shape
    seq = [x[:, t, :].astype(jnp.float32) for t in range(S)]
    for layer in params["gru"]:
        w_ih, w_hh = layer["w_ih"], layer["w_hh"]
        b_ih, b_hh = layer["b_ih"], layer["b_hh"]
        H = w_hh.shape[1]
        h = jnp.zeros((B, H), jnp.float32)
        out = []
        for x_t in seq:
            r = jax.nn.sigmoid(jnp.dot(x_t, w_ih[0:H].T, precision=hp) + b_ih[0:H]
                               + jnp.dot(h, w_hh[0:H].T, precision=hp) + b_hh[0:H])
            z = jax.nn.sigmoid(jnp.dot(x_t, w_ih[H:2 * H].T, precision=hp) + b_ih[H:2 * H]
                               + jnp.dot(h, w_hh[H:2 * H].T, precision=hp) + b_hh[H:2 * H])
            n = jnp.tanh(jnp.dot(x_t, w_ih[2 * H:].T, precision=hp) + b_ih[2 * H:]
                         + r * (jnp.dot(h, w_hh[2 * H:].T, precision=hp) + b_hh[2 * H:]))
            h = (1.0 - z) * n + z * h
            out.append(h)
        seq = out
    return jnp.dot(seq[-1], params["fc_w"].T, precision=hp) + params["fc_b"]


if __name__ == "__main__":
    input_size = 28
    hidden_size = 32
    num_layers = 2
    num_classes = 10
    batch, seq_len = 2, 8

    key = jax.random.PRNGKey(0)
    kx, kp = jax.random.split(key)
    x = jax.random.normal(kx, (batch, seq_len, input_size), jnp.float32)
    params = init_params(kp, input_size, hidden_size, num_layers, num_classes)

    packed_bf16 = pack_params(params, jnp.bfloat16)   # kernel parameters (one DMA)
    packed_f32 = pack_params(params, jnp.float32)     # for the packing check only

    out = my_gru_forward(x, packed_bf16, num_classes=num_classes)
    out = jax.block_until_ready(out)
    assert out.shape == (batch, num_classes)

    # 1) Packed fused-gate math (pure JAX, f32, highest precision) must equal the
    #    torch-style GRU reference -> validates packing + gate wiring.
    ref_torch = gru_reference(x, params)
    ref_packed_f32 = _forward_math(x, packed_f32, num_classes,
                                   precision=jax.lax.Precision.HIGHEST)
    assert jnp.allclose(ref_packed_f32, ref_torch, atol=1e-4, rtol=1e-4), \
        float(jnp.max(jnp.abs(ref_packed_f32 - ref_torch)))

    # 2) Pallas kernel must equal the identical bf16-operand math traced by XLA
    #    -> validates the Pallas/Mosaic lowering (bf16 operands, f32 accumulation).
    ref_packed_bf16 = _forward_math(x, packed_bf16, num_classes)
    assert jnp.allclose(out, ref_packed_bf16, atol=5e-3, rtol=5e-3), \
        float(jnp.max(jnp.abs(out - ref_packed_bf16)))

    print("KERNEL_OK")
</pallas_src>

<mosaic_0001>
module attributes {stable_mosaic.version = 11 : i64} {
  func.func @_fused_gru_fc_kernel(%arg0: memref<2x8x28xf32, #tpu.memory_space<vmem>>, %arg1: memref<3x72x96xbf16, #tpu.memory_space<vmem>>, %arg2: memref<2x10xf32, #tpu.memory_space<vmem>>) attributes {dimension_semantics = [], scalar_prefetch = 0 : i64, scratch_operands = 0 : i64, tpu.core_type = #tpu.core_type<tc>} {
    %c0 = arith.constant 0 : index
    %c0_0 = arith.constant 0 : index
    %c0_1 = arith.constant 0 : index
    %0 = vector.load %arg0[%c0, %c0_0, %c0_1] : memref<2x8x28xf32, #tpu.memory_space<vmem>>, vector<2x8x28xf32>
    %c0_2 = arith.constant 0 : index
    %c0_3 = arith.constant 0 : index
    %c0_4 = arith.constant 0 : index
    %1 = vector.load %arg1[%c0_2, %c0_3, %c0_4] : memref<3x72x96xbf16, #tpu.memory_space<vmem>>, vector<3x72x96xbf16>
    %2 = vector.shape_cast %0 : vector<2x8x28xf32> to vector<16x28xf32>
    %3 = arith.truncf %2 : vector<16x28xf32> to vector<16x28xbf16>
    %cst = arith.constant 0.000000e+00 : bf16
    %4 = vector.broadcast %cst : bf16 to vector<16x4xbf16>
    %5 = tpu.concatenate %3, %4 in 1 : vector<16x28xbf16>, vector<16x4xbf16> -> vector<16x32xbf16>
    %6 = vector.extract_strided_slice %1 {offsets = [0, 0, 0], sizes = [1, 72, 96], strides = [1, 1, 1]} : vector<3x72x96xbf16> to vector<1x72x96xbf16>
    %7 = vector.shape_cast %6 : vector<1x72x96xbf16> to vector<72x96xbf16>
    %8 = vector.extract_strided_slice %7 {offsets = [0, 0], sizes = [32, 96], strides = [1, 1]} : vector<72x96xbf16> to vector<32x96xbf16>
    %9 = vector.extract_strided_slice %7 {offsets = [32, 0], sizes = [32, 96], strides = [1, 1]} : vector<72x96xbf16> to vector<32x96xbf16>
    %10 = vector.extract_strided_slice %7 {offsets = [64, 0], sizes = [1, 96], strides = [1, 1]} : vector<72x96xbf16> to vector<1x96xbf16>
    %11 = arith.extf %10 : vector<1x96xbf16> to vector<1x96xf32>
    %12 = vector.extract_strided_slice %7 {offsets = [65, 0], sizes = [1, 96], strides = [1, 1]} : vector<72x96xbf16> to vector<1x96xbf16>
    %13 = arith.extf %12 : vector<1x96xbf16> to vector<1x96xf32>
    %cst_5 = arith.constant dense<0.000000e+00> : vector<16x96xf32>
    %14 = tpu.matmul %5, %8, %cst_5 {dimension_numbers = #tpu.dot_dimension_numbers<[1], [0], [0], [1], [0, 0, 1, 1], [], []>} : vector<16x32xbf16>, vector<32x96xbf16>, vector<16x96xf32> -> vector<16x96xf32>
    %15 = vector.broadcast %11 : vector<1x96xf32> to vector<16x96xf32>
    %16 = arith.addf %14, %15 : vector<16x96xf32>
    %cst_6 = arith.constant 0.000000e+00 : f32
    %17 = vector.broadcast %cst_6 : f32 to vector<2x32xf32>
    %18 = vector.extract_strided_slice %16 {offsets = [0, 0], sizes = [1, 96], strides = [1, 1]} : vector<16x96xf32> to vector<1x96xf32>
    %19 = vector.extract_strided_slice %16 {offsets = [8, 0], sizes = [1, 96], strides = [1, 1]} : vector<16x96xf32> to vector<1x96xf32>
    %20 = tpu.concatenate %18, %19 in 0 : vector<1x96xf32>, vector<1x96xf32> -> vector<2x96xf32>
    %21 = arith.truncf %17 : vector<2x32xf32> to vector<2x32xbf16>
    %cst_7 = arith.constant dense<0.000000e+00> : vector<2x96xf32>
    %22 = tpu.matmul %21, %9, %cst_7 {dimension_numbers = #tpu.dot_dimension_numbers<[1], [0], [0], [1], [0, 0, 1, 1], [], []>} : vector<2x32xbf16>, vector<32x96xbf16>, vector<2x96xf32> -> vector<2x96xf32>
    %23 = vector.broadcast %13 : vector<1x96xf32> to vector<2x96xf32>
    %24 = arith.addf %22, %23 : vector<2x96xf32>
    %25 = vector.extract_strided_slice %20 {offsets = [0, 0], sizes = [2, 64], strides = [1, 1]} : vector<2x96xf32> to vector<2x64xf32>
    %26 = vector.extract_strided_slice %24 {offsets = [0, 0], sizes = [2, 64], strides = [1, 1]} : vector<2x96xf32> to vector<2x64xf32>
    %27 = arith.addf %25, %26 : vector<2x64xf32>
    %28 = arith.negf %27 : vector<2x64xf32>
    %29 = math.exp %28 : vector<2x64xf32>
    %cst_8 = arith.constant 1.000000e+00 : f32
    %30 = vector.broadcast %cst_8 : f32 to vector<2x64xf32>
    %31 = arith.addf %30, %29 : vector<2x64xf32>
    %32 = arith.divf %30, %31 : vector<2x64xf32>
    %33 = vector.extract_strided_slice %32 {offsets = [0, 0], sizes = [2, 32], strides = [1, 1]} : vector<2x64xf32> to vector<2x32xf32>
    %34 = vector.extract_strided_slice %32 {offsets = [0, 32], sizes = [2, 32], strides = [1, 1]} : vector<2x64xf32> to vector<2x32xf32>
    %35 = vector.extract_strided_slice %20 {offsets = [0, 64], sizes = [2, 32], strides = [1, 1]} : vector<2x96xf32> to vector<2x32xf32>
    %36 = vector.extract_strided_slice %24 {offsets = [0, 64], sizes = [2, 32], strides = [1, 1]} : vector<2x96xf32> to vector<2x32xf32>
    %37 = arith.mulf %33, %36 : vector<2x32xf32>
    %38 = arith.addf %35, %37 : vector<2x32xf32>
    %39 = math.tanh %38 : vector<2x32xf32>
    %cst_9 = arith.constant 1.000000e+00 : f32
    %40 = vector.broadcast %cst_9 : f32 to vector<2x32xf32>
    %41 = arith.subf %40, %34 : vector<2x32xf32>
    %42 = arith.mulf %41, %39 : vector<2x32xf32>
    %43 = arith.mulf %34, %17 : vector<2x32xf32>
    %44 = arith.addf %42, %43 : vector<2x32xf32>
    %45 = vector.extract_strided_slice %16 {offsets = [1, 0], sizes = [1, 96], strides = [1, 1]} : vector<16x96xf32> to vector<1x96xf32>
    %46 = vector.extract_strided_slice %16 {offsets = [9, 0], sizes = [1, 96], strides = [1, 1]} : vector<16x96xf32> to vector<1x96xf32>
    %47 = tpu.concatenate %45, %46 in 0 : vector<1x96xf32>, vector<1x96xf32> -> vector<2x96xf32>
    %48 = arith.truncf %44 : vector<2x32xf32> to vector<2x32xbf16>
    %cst_10 = arith.constant dense<0.000000e+00> : vector<2x96xf32>
    %49 = tpu.matmul %48, %9, %cst_10 {dimension_numbers = #tpu.dot_dimension_numbers<[1], [0], [0], [1], [0, 0, 1, 1], [], []>} : vector<2x32xbf16>, vector<32x96xbf16>, vector<2x96xf32> -> vector<2x96xf32>
    %50 = vector.broadcast %13 : vector<1x96xf32> to vector<2x96xf32>
    %51 = arith.addf %49, %50 : vector<2x96xf32>
    %52 = vector.extract_strided_slice %47 {offsets = [0, 0], sizes = [2, 64], strides = [1, 1]} : vector<2x96xf32> to vector<2x64xf32>
    %53 = vector.extract_strided_slice %51 {offsets = [0, 0], sizes = [2, 64], strides = [1, 1]} : vector<2x96xf32> to vector<2x64xf32>
    %54 = arith.addf %52, %53 : vector<2x64xf32>
    %55 = arith.negf %54 : vector<2x64xf32>
    %56 = math.exp %55 : vector<2x64xf32>
    %cst_11 = arith.constant 1.000000e+00 : f32
    %57 = vector.broadcast %cst_11 : f32 to vector<2x64xf32>
    %58 = arith.addf %57, %56 : vector<2x64xf32>
    %59 = arith.divf %57, %58 : vector<2x64xf32>
    %60 = vector.extract_strided_slice %59 {offsets = [0, 0], sizes = [2, 32], strides = [1, 1]} : vector<2x64xf32> to vector<2x32xf32>
    %61 = vector.extract_strided_slice %59 {offsets = [0, 32], sizes = [2, 32], strides = [1, 1]} : vector<2x64xf32> to vector<2x32xf32>
    %62 = vector.extract_strided_slice %47 {offsets = [0, 64], sizes = [2, 32], strides = [1, 1]} : vector<2x96xf32> to vector<2x32xf32>
    %63 = vector.extract_strided_slice %51 {offsets = [0, 64], sizes = [2, 32], strides = [1, 1]} : vector<2x96xf32> to vector<2x32xf32>
    %64 = arith.mulf %60, %63 : vector<2x32xf32>
    %65 = arith.addf %62, %64 : vector<2x32xf32>
    %66 = math.tanh %65 : vector<2x32xf32>
    %cst_12 = arith.constant 1.000000e+00 : f32
    %67 = vector.broadcast %cst_12 : f32 to vector<2x32xf32>
    %68 = arith.subf %67, %61 : vector<2x32xf32>
    %69 = arith.mulf %68, %66 : vector<2x32xf32>
    %70 = arith.mulf %61, %44 : vector<2x32xf32>
    %71 = arith.addf %69, %70 : vector<2x32xf32>
    %72 = vector.extract_strided_slice %16 {offsets = [2, 0], sizes = [1, 96], strides = [1, 1]} : vector<16x96xf32> to vector<1x96xf32>
    %73 = vector.extract_strided_slice %16 {offsets = [10, 0], sizes = [1, 96], strides = [1, 1]} : vector<16x96xf32> to vector<1x96xf32>
    %74 = tpu.concatenate %72, %73 in 0 : vector<1x96xf32>, vector<1x96xf32> -> vector<2x96xf32>
    %75 = arith.truncf %71 : vector<2x32xf32> to vector<2x32xbf16>
    %cst_13 = arith.constant dense<0.000000e+00> : vector<2x96xf32>
    %76 = tpu.matmul %75, %9, %cst_13 {dimension_numbers = #tpu.dot_dimension_numbers<[1], [0], [0], [1], [0, 0, 1, 1], [], []>} : vector<2x32xbf16>, vector<32x96xbf16>, vector<2x96xf32> -> vector<2x96xf32>
    %77 = vector.broadcast %13 : vector<1x96xf32> to vector<2x96xf32>
    %78 = arith.addf %76, %77 : vector<2x96xf32>
    %79 = vector.extract_strided_slice %74 {offsets = [0, 0], sizes = [2, 64], strides = [1, 1]} : vector<2x96xf32> to vector<2x64xf32>
    %80 = vector.extract_strided_slice %78 {offsets = [0, 0], sizes = [2, 64], strides = [1, 1]} : vector<2x96xf32> to vector<2x64xf32>
    %81 = arith.addf %79, %80 : vector<2x64xf32>
    %82 = arith.negf %81 : vector<2x64xf32>
    %83 = math.exp %82 : vector<2x64xf32>
    %cst_14 = arith.constant 1.000000e+00 : f32
    %84 = vector.broadcast %cst_14 : f32 to vector<2x64xf32>
    %85 = arith.addf %84, %83 : vector<2x64xf32>
    %86 = arith.divf %84, %85 : vector<2x64xf32>
    %87 = vector.extract_strided_slice %86 {offsets = [0, 0], sizes = [2, 32], strides = [1, 1]} : vector<2x64xf32> to vector<2x32xf32>
    %88 = vector.extract_strided_slice %86 {offsets = [0, 32], sizes = [2, 32], strides = [1, 1]} : vector<2x64xf32> to vector<2x32xf32>
    %89 = vector.extract_strided_slice %74 {offsets = [0, 64], sizes = [2, 32], strides = [1, 1]} : vector<2x96xf32> to vector<2x32xf32>
    %90 = vector.extract_strided_slice %78 {offsets = [0, 64], sizes = [2, 32], strides = [1, 1]} : vector<2x96xf32> to vector<2x32xf32>
    %91 = arith.mulf %87, %90 : vector<2x32xf32>
    %92 = arith.addf %89, %91 : vector<2x32xf32>
    %93 = math.tanh %92 : vector<2x32xf32>
    %cst_15 = arith.constant 1.000000e+00 : f32
    %94 = vector.broadcast %cst_15 : f32 to vector<2x32xf32>
    %95 = arith.subf %94, %88 : vector<2x32xf32>
    %96 = arith.mulf %95, %93 : vector<2x32xf32>
    %97 = arith.mulf %88, %71 : vector<2x32xf32>
    %98 = arith.addf %96, %97 : vector<2x32xf32>
    %99 = vector.extract_strided_slice %16 {offsets = [3, 0], sizes = [1, 96], strides = [1, 1]} : vector<16x96xf32> to vector<1x96xf32>
    %100 = vector.extract_strided_slice %16 {offsets = [11, 0], sizes = [1, 96], strides = [1, 1]} : vector<16x96xf32> to vector<1x96xf32>
    %101 = tpu.concatenate %99, %100 in 0 : vector<1x96xf32>, vector<1x96xf32> -> vector<2x96xf32>
    %102 = arith.truncf %98 : vector<2x32xf32> to vector<2x32xbf16>
    %cst_16 = arith.constant dense<0.000000e+00> : vector<2x96xf32>
    %103 = tpu.matmul %102, %9, %cst_16 {dimension_numbers = #tpu.dot_dimension_numbers<[1], [0], [0], [1], [0, 0, 1, 1], [], []>} : vector<2x32xbf16>, vector<32x96xbf16>, vector<2x96xf32> -> vector<2x96xf32>
    %104 = vector.broadcast %13 : vector<1x96xf32> to vector<2x96xf32>
    %105 = arith.addf %103, %104 : vector<2x96xf32>
    %106 = vector.extract_strided_slice %101 {offsets = [0, 0], sizes = [2, 64], strides = [1, 1]} : vector<2x96xf32> to vector<2x64xf32>
    %107 = vector.extract_strided_slice %105 {offsets = [0, 0], sizes = [2, 64], strides = [1, 1]} : vector<2x96xf32> to vector<2x64xf32>
    %108 = arith.addf %106, %107 : vector<2x64xf32>
    %109 = arith.negf %108 : vector<2x64xf32>
    %110 = math.exp %109 : vector<2x64xf32>
    %cst_17 = arith.constant 1.000000e+00 : f32
    %111 = vector.broadcast %cst_17 : f32 to vector<2x64xf32>
    %112 = arith.addf %111, %110 : vector<2x64xf32>
    %113 = arith.divf %111, %112 : vector<2x64xf32>
    %114 = vector.extract_strided_slice %113 {offsets = [0, 0], sizes = [2, 32], strides = [1, 1]} : vector<2x64xf32> to vector<2x32xf32>
    %115 = vector.extract_strided_slice %113 {offsets = [0, 32], sizes = [2, 32], strides = [1, 1]} : vector<2x64xf32> to vector<2x32xf32>
    %116 = vector.extract_strided_slice %101 {offsets = [0, 64], sizes = [2, 32], strides = [1, 1]} : vector<2x96xf32> to vector<2x32xf32>
    %117 = vector.extract_strided_slice %105 {offsets = [0, 64], sizes = [2, 32], strides = [1, 1]} : vector<2x96xf32> to vector<2x32xf32>
    %118 = arith.mulf %114, %117 : vector<2x32xf32>
    %119 = arith.addf %116, %118 : vector<2x32xf32>
    %120 = math.tanh %119 : vector<2x32xf32>
    %cst_18 = arith.constant 1.000000e+00 : f32
    %121 = vector.broadcast %cst_18 : f32 to vector<2x32xf32>
    %122 = arith.subf %121, %115 : vector<2x32xf32>
    %123 = arith.mulf %122, %120 : vector<2x32xf32>
    %124 = arith.mulf %115, %98 : vector<2x32xf32>
    %125 = arith.addf %123, %124 : vector<2x32xf32>
    %126 = vector.extract_strided_slice %16 {offsets = [4, 0], sizes = [1, 96], strides = [1, 1]} : vector<16x96xf32> to vector<1x96xf32>
    %127 = vector.extract_strided_slice %16 {offsets = [12, 0], sizes = [1, 96], strides = [1, 1]} : vector<16x96xf32> to vector<1x96xf32>
    %128 = tpu.concatenate %126, %127 in 0 : vector<1x96xf32>, vector<1x96xf32> -> vector<2x96xf32>
    %129 = arith.truncf %125 : vector<2x32xf32> to vector<2x32xbf16>
    %cst_19 = arith.constant dense<0.000000e+00> : vector<2x96xf32>
    %130 = tpu.matmul %129, %9, %cst_19 {dimension_numbers = #tpu.dot_dimension_numbers<[1], [0], [0], [1], [0, 0, 1, 1], [], []>} : vector<2x32xbf16>, vector<32x96xbf16>, vector<2x96xf32> -> vector<2x96xf32>
    %131 = vector.broadcast %13 : vector<1x96xf32> to vector<2x96xf32>
    %132 = arith.addf %130, %131 : vector<2x96xf32>
    %133 = vector.extract_strided_slice %128 {offsets = [0, 0], sizes = [2, 64], strides = [1, 1]} : vector<2x96xf32> to vector<2x64xf32>
    %134 = vector.extract_strided_slice %132 {offsets = [0, 0], sizes = [2, 64], strides = [1, 1]} : vector<2x96xf32> to vector<2x64xf32>
    %135 = arith.addf %133, %134 : vector<2x64xf32>
    %136 = arith.negf %135 : vector<2x64xf32>
    %137 = math.exp %136 : vector<2x64xf32>
    %cst_20 = arith.constant 1.000000e+00 : f32
    %138 = vector.broadcast %cst_20 : f32 to vector<2x64xf32>
    %139 = arith.addf %138, %137 : vector<2x64xf32>
    %140 = arith.divf %138, %139 : vector<2x64xf32>
    %141 = vector.extract_strided_slice %140 {offsets = [0, 0], sizes = [2, 32], strides = [1, 1]} : vector<2x64xf32> to vector<2x32xf32>
    %142 = vector.extract_strided_slice %140 {offsets = [0, 32], sizes = [2, 32], strides = [1, 1]} : vector<2x64xf32> to vector<2x32xf32>
    %143 = vector.extract_strided_slice %128 {offsets = [0, 64], sizes = [2, 32], strides = [1, 1]} : vector<2x96xf32> to vector<2x32xf32>
    %144 = vector.extract_strided_slice %132 {offsets = [0, 64], sizes = [2, 32], strides = [1, 1]} : vector<2x96xf32> to vector<2x32xf32>
    %145 = arith.mulf %141, %144 : vector<2x32xf32>
    %146 = arith.addf %143, %145 : vector<2x32xf32>
    %147 = math.tanh %146 : vector<2x32xf32>
    %cst_21 = arith.constant 1.000000e+00 : f32
    %148 = vector.broadcast %cst_21 : f32 to vector<2x32xf32>
    %149 = arith.subf %148, %142 : vector<2x32xf32>
    %150 = arith.mulf %149, %147 : vector<2x32xf32>
    %151 = arith.mulf %142, %125 : vector<2x32xf32>
    %152 = arith.addf %150, %151 : vector<2x32xf32>
    %153 = vector.extract_strided_slice %16 {offsets = [5, 0], sizes = [1, 96], strides = [1, 1]} : vector<16x96xf32> to vector<1x96xf32>
    %154 = vector.extract_strided_slice %16 {offsets = [13, 0], sizes = [1, 96], strides = [1, 1]} : vector<16x96xf32> to vector<1x96xf32>
    %155 = tpu.concatenate %153, %154 in 0 : vector<1x96xf32>, vector<1x96xf32> -> vector<2x96xf32>
    %156 = arith.truncf %152 : vector<2x32xf32> to vector<2x32xbf16>
    %cst_22 = arith.constant dense<0.000000e+00> : vector<2x96xf32>
    %157 = tpu.matmul %156, %9, %cst_22 {dimension_numbers = #tpu.dot_dimension_numbers<[1], [0], [0], [1], [0, 0, 1, 1], [], []>} : vector<2x32xbf16>, vector<32x96xbf16>, vector<2x96xf32> -> vector<2x96xf32>
    %158 = vector.broadcast %13 : vector<1x96xf32> to vector<2x96xf32>
    %159 = arith.addf %157, %158 : vector<2x96xf32>
    %160 = vector.extract_strided_slice %155 {offsets = [0, 0], sizes = [2, 64], strides = [1, 1]} : vector<2x96xf32> to vector<2x64xf32>
    %161 = vector.extract_strided_slice %159 {offsets = [0, 0], sizes = [2, 64], strides = [1, 1]} : vector<2x96xf32> to vector<2x64xf32>
    %162 = arith.addf %160, %161 : vector<2x64xf32>
    %163 = arith.negf %162 : vector<2x64xf32>
    %164 = math.exp %163 : vector<2x64xf32>
    %cst_23 = arith.constant 1.000000e+00 : f32
    %165 = vector.broadcast %cst_23 : f32 to vector<2x64xf32>
    %166 = arith.addf %165, %164 : vector<2x64xf32>
    %167 = arith.divf %165, %166 : vector<2x64xf32>
    %168 = vector.extract_strided_slice %167 {offsets = [0, 0], sizes = [2, 32], strides = [1, 1]} : vector<2x64xf32> to vector<2x32xf32>
    %169 = vector.extract_strided_slice %167 {offsets = [0, 32], sizes = [2, 32], strides = [1, 1]} : vector<2x64xf32> to vector<2x32xf32>
    %170 = vector.extract_strided_slice %155 {offsets = [0, 64], sizes = [2, 32], strides = [1, 1]} : vector<2x96xf32> to vector<2x32xf32>
    %171 = vector.extract_strided_slice %159 {offsets = [0, 64], sizes = [2, 32], strides = [1, 1]} : vector<2x96xf32> to vector<2x32xf32>
    %172 = arith.mulf %168, %171 : vector<2x32xf32>
    %173 = arith.addf %170, %172 : vector<2x32xf32>
    %174 = math.tanh %173 : vector<2x32xf32>
    %cst_24 = arith.constant 1.000000e+00 : f32
    %175 = vector.broadcast %cst_24 : f32 to vector<2x32xf32>
    %176 = arith.subf %175, %169 : vector<2x32xf32>
    %177 = arith.mulf %176, %174 : vector<2x32xf32>
    %178 = arith.mulf %169, %152 : vector<2x32xf32>
    %179 = arith.addf %177, %178 : vector<2x32xf32>
    %180 = vector.extract_strided_slice %16 {offsets = [6, 0], sizes = [1, 96], strides = [1, 1]} : vector<16x96xf32> to vector<1x96xf32>
    %181 = vector.extract_strided_slice %16 {offsets = [14, 0], sizes = [1, 96], strides = [1, 1]} : vector<16x96xf32> to vector<1x96xf32>
    %182 = tpu.concatenate %180, %181 in 0 : vector<1x96xf32>, vector<1x96xf32> -> vector<2x96xf32>
    %183 = arith.truncf %179 : vector<2x32xf32> to vector<2x32xbf16>
    %cst_25 = arith.constant dense<0.000000e+00> : vector<2x96xf32>
    %184 = tpu.matmul %183, %9, %cst_25 {dimension_numbers = #tpu.dot_dimension_numbers<[1], [0], [0], [1], [0, 0, 1, 1], [], []>} : vector<2x32xbf16>, vector<32x96xbf16>, vector<2x96xf32> -> vector<2x96xf32>
    %185 = vector.broadcast %13 : vector<1x96xf32> to vector<2x96xf32>
    %186 = arith.addf %184, %185 : vector<2x96xf32>
    %187 = vector.extract_strided_slice %182 {offsets = [0, 0], sizes = [2, 64], strides = [1, 1]} : vector<2x96xf32> to vector<2x64xf32>
    %188 = vector.extract_strided_slice %186 {offsets = [0, 0], sizes = [2, 64], strides = [1, 1]} : vector<2x96xf32> to vector<2x64xf32>
    %189 = arith.addf %187, %188 : vector<2x64xf32>
    %190 = arith.negf %189 : vector<2x64xf32>
    %191 = math.exp %190 : vector<2x64xf32>
    %cst_26 = arith.constant 1.000000e+00 : f32
    %192 = vector.broadcast %cst_26 : f32 to vector<2x64xf32>
    %193 = arith.addf %192, %191 : vector<2x64xf32>
    %194 = arith.divf %192, %193 : vector<2x64xf32>
    %195 = vector.extract_strided_slice %194 {offsets = [0, 0], sizes = [2, 32], strides = [1, 1]} : vector<2x64xf32> to vector<2x32xf32>
    %196 = vector.extract_strided_slice %194 {offsets = [0, 32], sizes = [2, 32], strides = [1, 1]} : vector<2x64xf32> to vector<2x32xf32>
    %197 = vector.extract_strided_slice %182 {offsets = [0, 64], sizes = [2, 32], strides = [1, 1]} : vector<2x96xf32> to vector<2x32xf32>
    %198 = vector.extract_strided_slice %186 {offsets = [0, 64], sizes = [2, 32], strides = [1, 1]} : vector<2x96xf32> to vector<2x32xf32>
    %199 = arith.mulf %195, %198 : vector<2x32xf32>
    %200 = arith.addf %197, %199 : vector<2x32xf32>
    %201 = math.tanh %200 : vector<2x32xf32>
    %cst_27 = arith.constant 1.000000e+00 : f32
    %202 = vector.broadcast %cst_27 : f32 to vector<2x32xf32>
    %203 = arith.subf %202, %196 : vector<2x32xf32>
    %204 = arith.mulf %203, %201 : vector<2x32xf32>
    %205 = arith.mulf %196, %179 : vector<2x32xf32>
    %206 = arith.addf %204, %205 : vector<2x32xf32>
    %207 = vector.extract_strided_slice %16 {offsets = [7, 0], sizes = [1, 96], strides = [1, 1]} : vector<16x96xf32> to vector<1x96xf32>
    %208 = vector.extract_strided_slice %16 {offsets = [15, 0], sizes = [1, 96], strides = [1, 1]} : vector<16x96xf32> to vector<1x96xf32>
    %209 = tpu.concatenate %207, %208 in 0 : vector<1x96xf32>, vector<1x96xf32> -> vector<2x96xf32>
    %210 = arith.truncf %206 : vector<2x32xf32> to vector<2x32xbf16>
    %cst_28 = arith.constant dense<0.000000e+00> : vector<2x96xf32>
    %211 = tpu.matmul %210, %9, %cst_28 {dimension_numbers = #tpu.dot_dimension_numbers<[1], [0], [0], [1], [0, 0, 1, 1], [], []>} : vector<2x32xbf16>, vector<32x96xbf16>, vector<2x96xf32> -> vector<2x96xf32>
    %212 = vector.broadcast %13 : vector<1x96xf32> to vector<2x96xf32>
    %213 = arith.addf %211, %212 : vector<2x96xf32>
    %214 = vector.extract_strided_slice %209 {offsets = [0, 0], sizes = [2, 64], strides = [1, 1]} : vector<2x96xf32> to vector<2x64xf32>
    %215 = vector.extract_strided_slice %213 {offsets = [0, 0], sizes = [2, 64], strides = [1, 1]} : vector<2x96xf32> to vector<2x64xf32>
    %216 = arith.addf %214, %215 : vector<2x64xf32>
    %217 = arith.negf %216 : vector<2x64xf32>
    %218 = math.exp %217 : vector<2x64xf32>
    %cst_29 = arith.constant 1.000000e+00 : f32
    %219 = vector.broadcast %cst_29 : f32 to vector<2x64xf32>
    %220 = arith.addf %219, %218 : vector<2x64xf32>
    %221 = arith.divf %219, %220 : vector<2x64xf32>
    %222 = vector.extract_strided_slice %221 {offsets = [0, 0], sizes = [2, 32], strides = [1, 1]} : vector<2x64xf32> to vector<2x32xf32>
    %223 = vector.extract_strided_slice %221 {offsets = [0, 32], sizes = [2, 32], strides = [1, 1]} : vector<2x64xf32> to vector<2x32xf32>
    %224 = vector.extract_strided_slice %209 {offsets = [0, 64], sizes = [2, 32], strides = [1, 1]} : vector<2x96xf32> to vector<2x32xf32>
    %225 = vector.extract_strided_slice %213 {offsets = [0, 64], sizes = [2, 32], strides = [1, 1]} : vector<2x96xf32> to vector<2x32xf32>
    %226 = arith.mulf %222, %225 : vector<2x32xf32>
    %227 = arith.addf %224, %226 : vector<2x32xf32>
    %228 = math.tanh %227 : vector<2x32xf32>
    %cst_30 = arith.constant 1.000000e+00 : f32
    %229 = vector.broadcast %cst_30 : f32 to vector<2x32xf32>
    %230 = arith.subf %229, %223 : vector<2x32xf32>
    %231 = arith.mulf %230, %228 : vector<2x32xf32>
    %232 = arith.mulf %223, %206 : vector<2x32xf32>
    %233 = arith.addf %231, %232 : vector<2x32xf32>
    %234 = tpu.concatenate %44, %71, %98, %125, %152, %179, %206, %233 in 0 : vector<2x32xf32>, vector<2x32xf32>, vector<2x32xf32>, vector<2x32xf32>, vector<2x32xf32>, vector<2x32xf32>, vector<2x32xf32>, vector<2x32xf32> -> vector<16x32xf32>
    %235 = arith.truncf %234 : vector<16x32xf32> to vector<16x32xbf16>
    %236 = vector.extract_strided_slice %1 {offsets = [1, 0, 0], sizes = [1, 72, 96], strides = [1, 1, 1]} : vector<3x72x96xbf16> to vector<1x72x96xbf16>
    %237 = vector.shape_cast %236 : vector<1x72x96xbf16> to vector<72x96xbf16>
    %238 = vector.extract_strided_slice %237 {offsets = [0, 0], sizes = [32, 96], strides = [1, 1]} : vector<72x96xbf16> to vector<32x96xbf16>
    %239 = vector.extract_strided_slice %237 {offsets = [32, 0], sizes = [32, 96], strides = [1, 1]} : vector<72x96xbf16> to vector<32x96xbf16>
    %240 = vector.extract_strided_slice %237 {offsets = [64, 0], sizes = [1, 96], strides = [1, 1]} : vector<72x96xbf16> to vector<1x96xbf16>
    %241 = arith.extf %240 : vector<1x96xbf16> to vector<1x96xf32>
    %242 = vector.extract_strided_slice %237 {offsets = [65, 0], sizes = [1, 96], strides = [1, 1]} : vector<72x96xbf16> to vector<1x96xbf16>
    %243 = arith.extf %242 : vector<1x96xbf16> to vector<1x96xf32>
    %cst_31 = arith.constant dense<0.000000e+00> : vector<16x96xf32>
    %244 = tpu.matmul %235, %238, %cst_31 {dimension_numbers = #tpu.dot_dimension_numbers<[1], [0], [0], [1], [0, 0, 1, 1], [], []>} : vector<16x32xbf16>, vector<32x96xbf16>, vector<16x96xf32> -> vector<16x96xf32>
    %245 = vector.broadcast %241 : vector<1x96xf32> to vector<16x96xf32>
    %246 = arith.addf %244, %245 : vector<16x96xf32>
    %cst_32 = arith.constant 0.000000e+00 : f32
    %247 = vector.broadcast %cst_32 : f32 to vector<2x32xf32>
    %248 = vector.extract_strided_slice %246 {offsets = [0, 0], sizes = [2, 96], strides = [1, 1]} : vector<16x96xf32> to vector<2x96xf32>
    %249 = arith.truncf %247 : vector<2x32xf32> to vector<2x32xbf16>
    %cst_33 = arith.constant dense<0.000000e+00> : vector<2x96xf32>
    %250 = tpu.matmul %249, %239, %cst_33 {dimension_numbers = #tpu.dot_dimension_numbers<[1], [0], [0], [1], [0, 0, 1, 1], [], []>} : vector<2x32xbf16>, vector<32x96xbf16>, vector<2x96xf32> -> vector<2x96xf32>
    %251 = vector.broadcast %243 : vector<1x96xf32> to vector<2x96xf32>
    %252 = arith.addf %250, %251 : vector<2x96xf32>
    %253 = vector.extract_strided_slice %248 {offsets = [0, 0], sizes = [2, 64], strides = [1, 1]} : vector<2x96xf32> to vector<2x64xf32>
    %254 = vector.extract_strided_slice %252 {offsets = [0, 0], sizes = [2, 64], strides = [1, 1]} : vector<2x96xf32> to vector<2x64xf32>
    %255 = arith.addf %253, %254 : vector<2x64xf32>
    %256 = arith.negf %255 : vector<2x64xf32>
    %257 = math.exp %256 : vector<2x64xf32>
    %cst_34 = arith.constant 1.000000e+00 : f32
    %258 = vector.broadcast %cst_34 : f32 to vector<2x64xf32>
    %259 = arith.addf %258, %257 : vector<2x64xf32>
    %260 = arith.divf %258, %259 : vector<2x64xf32>
    %261 = vector.extract_strided_slice %260 {offsets = [0, 0], sizes = [2, 32], strides = [1, 1]} : vector<2x64xf32> to vector<2x32xf32>
    %262 = vector.extract_strided_slice %260 {offsets = [0, 32], sizes = [2, 32], strides = [1, 1]} : vector<2x64xf32> to vector<2x32xf32>
    %263 = vector.extract_strided_slice %248 {offsets = [0, 64], sizes = [2, 32], strides = [1, 1]} : vector<2x96xf32> to vector<2x32xf32>
    %264 = vector.extract_strided_slice %252 {offsets = [0, 64], sizes = [2, 32], strides = [1, 1]} : vector<2x96xf32> to vector<2x32xf32>
    %265 = arith.mulf %261, %264 : vector<2x32xf32>
    %266 = arith.addf %263, %265 : vector<2x32xf32>
    %267 = math.tanh %266 : vector<2x32xf32>
    %cst_35 = arith.constant 1.000000e+00 : f32
    %268 = vector.broadcast %cst_35 : f32 to vector<2x32xf32>
    %269 = arith.subf %268, %262 : vector<2x32xf32>
    %270 = arith.mulf %269, %267 : vector<2x32xf32>
    %271 = arith.mulf %262, %247 : vector<2x32xf32>
    %272 = arith.addf %270, %271 : vector<2x32xf32>
    %273 = vector.extract_strided_slice %246 {offsets = [2, 0], sizes = [2, 96], strides = [1, 1]} : vector<16x96xf32> to vector<2x96xf32>
    %274 = arith.truncf %272 : vector<2x32xf32> to vector<2x32xbf16>
    %cst_36 = arith.constant dense<0.000000e+00> : vector<2x96xf32>
    %275 = tpu.matmul %274, %239, %cst_36 {dimension_numbers = #tpu.dot_dimension_numbers<[1], [0], [0], [1], [0, 0, 1, 1], [], []>} : vector<2x32xbf16>, vector<32x96xbf16>, vector<2x96xf32> -> vector<2x96xf32>
    %276 = vector.broadcast %243 : vector<1x96xf32> to vector<2x96xf32>
    %277 = arith.addf %275, %276 : vector<2x96xf32>
    %278 = vector.extract_strided_slice %273 {offsets = [0, 0], sizes = [2, 64], strides = [1, 1]} : vector<2x96xf32> to vector<2x64xf32>
    %279 = vector.extract_strided_slice %277 {offsets = [0, 0], sizes = [2, 64], strides = [1, 1]} : vector<2x96xf32> to vector<2x64xf32>
    %280 = arith.addf %278, %279 : vector<2x64xf32>
    %281 = arith.negf %280 : vector<2x64xf32>
    %282 = math.exp %281 : vector<2x64xf32>
    %cst_37 = arith.constant 1.000000e+00 : f32
    %283 = vector.broadcast %cst_37 : f32 to vector<2x64xf32>
    %284 = arith.addf %283, %282 : vector<2x64xf32>
    %285 = arith.divf %283, %284 : vector<2x64xf32>
    %286 = vector.extract_strided_slice %285 {offsets = [0, 0], sizes = [2, 32], strides = [1, 1]} : vector<2x64xf32> to vector<2x32xf32>
    %287 = vector.extract_strided_slice %285 {offsets = [0, 32], sizes = [2, 32], strides = [1, 1]} : vector<2x64xf32> to vector<2x32xf32>
    %288 = vector.extract_strided_slice %273 {offsets = [0, 64], sizes = [2, 32], strides = [1, 1]} : vector<2x96xf32> to vector<2x32xf32>
    %289 = vector.extract_strided_slice %277 {offsets = [0, 64], sizes = [2, 32], strides = [1, 1]} : vector<2x96xf32> to vector<2x32xf32>
    %290 = arith.mulf %286, %289 : vector<2x32xf32>
    %291 = arith.addf %288, %290 : vector<2x32xf32>
    %292 = math.tanh %291 : vector<2x32xf32>
    %cst_38 = arith.constant 1.000000e+00 : f32
    %293 = vector.broadcast %cst_38 : f32 to vector<2x32xf32>
    %294 = arith.subf %293, %287 : vector<2x32xf32>
    %295 = arith.mulf %294, %292 : vector<2x32xf32>
    %296 = arith.mulf %287, %272 : vector<2x32xf32>
    %297 = arith.addf %295, %296 : vector<2x32xf32>
    %298 = vector.extract_strided_slice %246 {offsets = [4, 0], sizes = [2, 96], strides = [1, 1]} : vector<16x96xf32> to vector<2x96xf32>
    %299 = arith.truncf %297 : vector<2x32xf32> to vector<2x32xbf16>
    %cst_39 = arith.constant dense<0.000000e+00> : vector<2x96xf32>
    %300 = tpu.matmul %299, %239, %cst_39 {dimension_numbers = #tpu.dot_dimension_numbers<[1], [0], [0], [1], [0, 0, 1, 1], [], []>} : vector<2x32xbf16>, vector<32x96xbf16>, vector<2x96xf32> -> vector<2x96xf32>
    %301 = vector.broadcast %243 : vector<1x96xf32> to vector<2x96xf32>
    %302 = arith.addf %300, %301 : vector<2x96xf32>
    %303 = vector.extract_strided_slice %298 {offsets = [0, 0], sizes = [2, 64], strides = [1, 1]} : vector<2x96xf32> to vector<2x64xf32>
    %304 = vector.extract_strided_slice %302 {offsets = [0, 0], sizes = [2, 64], strides = [1, 1]} : vector<2x96xf32> to vector<2x64xf32>
    %305 = arith.addf %303, %304 : vector<2x64xf32>
    %306 = arith.negf %305 : vector<2x64xf32>
    %307 = math.exp %306 : vector<2x64xf32>
    %cst_40 = arith.constant 1.000000e+00 : f32
    %308 = vector.broadcast %cst_40 : f32 to vector<2x64xf32>
    %309 = arith.addf %308, %307 : vector<2x64xf32>
    %310 = arith.divf %308, %309 : vector<2x64xf32>
    %311 = vector.extract_strided_slice %310 {offsets = [0, 0], sizes = [2, 32], strides = [1, 1]} : vector<2x64xf32> to vector<2x32xf32>
    %312 = vector.extract_strided_slice %310 {offsets = [0, 32], sizes = [2, 32], strides = [1, 1]} : vector<2x64xf32> to vector<2x32xf32>
    %313 = vector.extract_strided_slice %298 {offsets = [0, 64], sizes = [2, 32], strides = [1, 1]} : vector<2x96xf32> to vector<2x32xf32>
    %314 = vector.extract_strided_slice %302 {offsets = [0, 64], sizes = [2, 32], strides = [1, 1]} : vector<2x96xf32> to vector<2x32xf32>
    %315 = arith.mulf %311, %314 : vector<2x32xf32>
    %316 = arith.addf %313, %315 : vector<2x32xf32>
    %317 = math.tanh %316 : vector<2x32xf32>
    %cst_41 = arith.constant 1.000000e+00 : f32
    %318 = vector.broadcast %cst_41 : f32 to vector<2x32xf32>
    %319 = arith.subf %318, %312 : vector<2x32xf32>
    %320 = arith.mulf %319, %317 : vector<2x32xf32>
    %321 = arith.mulf %312, %297 : vector<2x32xf32>
    %322 = arith.addf %320, %321 : vector<2x32xf32>
    %323 = vector.extract_strided_slice %246 {offsets = [6, 0], sizes = [2, 96], strides = [1, 1]} : vector<16x96xf32> to vector<2x96xf32>
    %324 = arith.truncf %322 : vector<2x32xf32> to vector<2x32xbf16>
    %cst_42 = arith.constant dense<0.000000e+00> : vector<2x96xf32>
    %325 = tpu.matmul %324, %239, %cst_42 {dimension_numbers = #tpu.dot_dimension_numbers<[1], [0], [0], [1], [0, 0, 1, 1], [], []>} : vector<2x32xbf16>, vector<32x96xbf16>, vector<2x96xf32> -> vector<2x96xf32>
    %326 = vector.broadcast %243 : vector<1x96xf32> to vector<2x96xf32>
    %327 = arith.addf %325, %326 : vector<2x96xf32>
    %328 = vector.extract_strided_slice %323 {offsets = [0, 0], sizes = [2, 64], strides = [1, 1]} : vector<2x96xf32> to vector<2x64xf32>
    %329 = vector.extract_strided_slice %327 {offsets = [0, 0], sizes = [2, 64], strides = [1, 1]} : vector<2x96xf32> to vector<2x64xf32>
    %330 = arith.addf %328, %329 : vector<2x64xf32>
    %331 = arith.negf %330 : vector<2x64xf32>
    %332 = math.exp %331 : vector<2x64xf32>
    %cst_43 = arith.constant 1.000000e+00 : f32
    %333 = vector.broadcast %cst_43 : f32 to vector<2x64xf32>
    %334 = arith.addf %333, %332 : vector<2x64xf32>
    %335 = arith.divf %333, %334 : vector<2x64xf32>
    %336 = vector.extract_strided_slice %335 {offsets = [0, 0], sizes = [2, 32], strides = [1, 1]} : vector<2x64xf32> to vector<2x32xf32>
    %337 = vector.extract_strided_slice %335 {offsets = [0, 32], sizes = [2, 32], strides = [1, 1]} : vector<2x64xf32> to vector<2x32xf32>
    %338 = vector.extract_strided_slice %323 {offsets = [0, 64], sizes = [2, 32], strides = [1, 1]} : vector<2x96xf32> to vector<2x32xf32>
    %339 = vector.extract_strided_slice %327 {offsets = [0, 64], sizes = [2, 32], strides = [1, 1]} : vector<2x96xf32> to vector<2x32xf32>
    %340 = arith.mulf %336, %339 : vector<2x32xf32>
    %341 = arith.addf %338, %340 : vector<2x32xf32>
    %342 = math.tanh %341 : vector<2x32xf32>
    %cst_44 = arith.constant 1.000000e+00 : f32
    %343 = vector.broadcast %cst_44 : f32 to vector<2x32xf32>
    %344 = arith.subf %343, %337 : vector<2x32xf32>
    %345 = arith.mulf %344, %342 : vector<2x32xf32>
    %346 = arith.mulf %337, %322 : vector<2x32xf32>
    %347 = arith.addf %345, %346 : vector<2x32xf32>
    %348 = vector.extract_strided_slice %246 {offsets = [8, 0], sizes = [2, 96], strides = [1, 1]} : vector<16x96xf32> to vector<2x96xf32>
    %349 = arith.truncf %347 : vector<2x32xf32> to vector<2x32xbf16>
    %cst_45 = arith.constant dense<0.000000e+00> : vector<2x96xf32>
    %350 = tpu.matmul %349, %239, %cst_45 {dimension_numbers = #tpu.dot_dimension_numbers<[1], [0], [0], [1], [0, 0, 1, 1], [], []>} : vector<2x32xbf16>, vector<32x96xbf16>, vector<2x96xf32> -> vector<2x96xf32>
    %351 = vector.broadcast %243 : vector<1x96xf32> to vector<2x96xf32>
    %352 = arith.addf %350, %351 : vector<2x96xf32>
    %353 = vector.extract_strided_slice %348 {offsets = [0, 0], sizes = [2, 64], strides = [1, 1]} : vector<2x96xf32> to vector<2x64xf32>
    %354 = vector.extract_strided_slice %352 {offsets = [0, 0], sizes = [2, 64], strides = [1, 1]} : vector<2x96xf32> to vector<2x64xf32>
    %355 = arith.addf %353, %354 : vector<2x64xf32>
    %356 = arith.negf %355 : vector<2x64xf32>
    %357 = math.exp %356 : vector<2x64xf32>
    %cst_46 = arith.constant 1.000000e+00 : f32
    %358 = vector.broadcast %cst_46 : f32 to vector<2x64xf32>
    %359 = arith.addf %358, %357 : vector<2x64xf32>
    %360 = arith.divf %358, %359 : vector<2x64xf32>
    %361 = vector.extract_strided_slice %360 {offsets = [0, 0], sizes = [2, 32], strides = [1, 1]} : vector<2x64xf32> to vector<2x32xf32>
    %362 = vector.extract_strided_slice %360 {offsets = [0, 32], sizes = [2, 32], strides = [1, 1]} : vector<2x64xf32> to vector<2x32xf32>
    %363 = vector.extract_strided_slice %348 {offsets = [0, 64], sizes = [2, 32], strides = [1, 1]} : vector<2x96xf32> to vector<2x32xf32>
    %364 = vector.extract_strided_slice %352 {offsets = [0, 64], sizes = [2, 32], strides = [1, 1]} : vector<2x96xf32> to vector<2x32xf32>
    %365 = arith.mulf %361, %364 : vector<2x32xf32>
    %366 = arith.addf %363, %365 : vector<2x32xf32>
    %367 = math.tanh %366 : vector<2x32xf32>
    %cst_47 = arith.constant 1.000000e+00 : f32
    %368 = vector.broadcast %cst_47 : f32 to vector<2x32xf32>
    %369 = arith.subf %368, %362 : vector<2x32xf32>
    %370 = arith.mulf %369, %367 : vector<2x32xf32>
    %371 = arith.mulf %362, %347 : vector<2x32xf32>
    %372 = arith.addf %370, %371 : vector<2x32xf32>
    %373 = vector.extract_strided_slice %246 {offsets = [10, 0], sizes = [2, 96], strides = [1, 1]} : vector<16x96xf32> to vector<2x96xf32>
    %374 = arith.truncf %372 : vector<2x32xf32> to vector<2x32xbf16>
    %cst_48 = arith.constant dense<0.000000e+00> : vector<2x96xf32>
    %375 = tpu.matmul %374, %239, %cst_48 {dimension_numbers = #tpu.dot_dimension_numbers<[1], [0], [0], [1], [0, 0, 1, 1], [], []>} : vector<2x32xbf16>, vector<32x96xbf16>, vector<2x96xf32> -> vector<2x96xf32>
    %376 = vector.broadcast %243 : vector<1x96xf32> to vector<2x96xf32>
    %377 = arith.addf %375, %376 : vector<2x96xf32>
    %378 = vector.extract_strided_slice %373 {offsets = [0, 0], sizes = [2, 64], strides = [1, 1]} : vector<2x96xf32> to vector<2x64xf32>
    %379 = vector.extract_strided_slice %377 {offsets = [0, 0], sizes = [2, 64], strides = [1, 1]} : vector<2x96xf32> to vector<2x64xf32>
    %380 = arith.addf %378, %379 : vector<2x64xf32>
    %381 = arith.negf %380 : vector<2x64xf32>
    %382 = math.exp %381 : vector<2x64xf32>
    %cst_49 = arith.constant 1.000000e+00 : f32
    %383 = vector.broadcast %cst_49 : f32 to vector<2x64xf32>
    %384 = arith.addf %383, %382 : vector<2x64xf32>
    %385 = arith.divf %383, %384 : vector<2x64xf32>
    %386 = vector.extract_strided_slice %385 {offsets = [0, 0], sizes = [2, 32], strides = [1, 1]} : vector<2x64xf32> to vector<2x32xf32>
    %387 = vector.extract_strided_slice %385 {offsets = [0, 32], sizes = [2, 32], strides = [1, 1]} : vector<2x64xf32> to vector<2x32xf32>
    %388 = vector.extract_strided_slice %373 {offsets = [0, 64], sizes = [2, 32], strides = [1, 1]} : vector<2x96xf32> to vector<2x32xf32>
    %389 = vector.extract_strided_slice %377 {offsets = [0, 64], sizes = [2, 32], strides = [1, 1]} : vector<2x96xf32> to vector<2x32xf32>
    %390 = arith.mulf %386, %389 : vector<2x32xf32>
    %391 = arith.addf %388, %390 : vector<2x32xf32>
    %392 = math.tanh %391 : vector<2x32xf32>
    %cst_50 = arith.constant 1.000000e+00 : f32
    %393 = vector.broadcast %cst_50 : f32 to vector<2x32xf32>
    %394 = arith.subf %393, %387 : vector<2x32xf32>
    %395 = arith.mulf %394, %392 : vector<2x32xf32>
    %396 = arith.mulf %387, %372 : vector<2x32xf32>
    %397 = arith.addf %395, %396 : vector<2x32xf32>
    %398 = vector.extract_strided_slice %246 {offsets = [12, 0], sizes = [2, 96], strides = [1, 1]} : vector<16x96xf32> to vector<2x96xf32>
    %399 = arith.truncf %397 : vector<2x32xf32> to vector<2x32xbf16>
    %cst_51 = arith.constant dense<0.000000e+00> : vector<2x96xf32>
    %400 = tpu.matmul %399, %239, %cst_51 {dimension_numbers = #tpu.dot_dimension_numbers<[1], [0], [0], [1], [0, 0, 1, 1], [], []>} : vector<2x32xbf16>, vector<32x96xbf16>, vector<2x96xf32> -> vector<2x96xf32>
    %401 = vector.broadcast %243 : vector<1x96xf32> to vector<2x96xf32>
    %402 = arith.addf %400, %401 : vector<2x96xf32>
    %403 = vector.extract_strided_slice %398 {offsets = [0, 0], sizes = [2, 64], strides = [1, 1]} : vector<2x96xf32> to vector<2x64xf32>
    %404 = vector.extract_strided_slice %402 {offsets = [0, 0], sizes = [2, 64], strides = [1, 1]} : vector<2x96xf32> to vector<2x64xf32>
    %405 = arith.addf %403, %404 : vector<2x64xf32>
    %406 = arith.negf %405 : vector<2x64xf32>
    %407 = math.exp %406 : vector<2x64xf32>
    %cst_52 = arith.constant 1.000000e+00 : f32
    %408 = vector.broadcast %cst_52 : f32 to vector<2x64xf32>
    %409 = arith.addf %408, %407 : vector<2x64xf32>
    %410 = arith.divf %408, %409 : vector<2x64xf32>
    %411 = vector.extract_strided_slice %410 {offsets = [0, 0], sizes = [2, 32], strides = [1, 1]} : vector<2x64xf32> to vector<2x32xf32>
    %412 = vector.extract_strided_slice %410 {offsets = [0, 32], sizes = [2, 32], strides = [1, 1]} : vector<2x64xf32> to vector<2x32xf32>
    %413 = vector.extract_strided_slice %398 {offsets = [0, 64], sizes = [2, 32], strides = [1, 1]} : vector<2x96xf32> to vector<2x32xf32>
    %414 = vector.extract_strided_slice %402 {offsets = [0, 64], sizes = [2, 32], strides = [1, 1]} : vector<2x96xf32> to vector<2x32xf32>
    %415 = arith.mulf %411, %414 : vector<2x32xf32>
    %416 = arith.addf %413, %415 : vector<2x32xf32>
    %417 = math.tanh %416 : vector<2x32xf32>
    %cst_53 = arith.constant 1.000000e+00 : f32
    %418 = vector.broadcast %cst_53 : f32 to vector<2x32xf32>
    %419 = arith.subf %418, %412 : vector<2x32xf32>
    %420 = arith.mulf %419, %417 : vector<2x32xf32>
    %421 = arith.mulf %412, %397 : vector<2x32xf32>
    %422 = arith.addf %420, %421 : vector<2x32xf32>
    %423 = vector.extract_strided_slice %246 {offsets = [14, 0], sizes = [2, 96], strides = [1, 1]} : vector<16x96xf32> to vector<2x96xf32>
    %424 = arith.truncf %422 : vector<2x32xf32> to vector<2x32xbf16>
    %cst_54 = arith.constant dense<0.000000e+00> : vector<2x96xf32>
    %425 = tpu.matmul %424, %239, %cst_54 {dimension_numbers = #tpu.dot_dimension_numbers<[1], [0], [0], [1], [0, 0, 1, 1], [], []>} : vector<2x32xbf16>, vector<32x96xbf16>, vector<2x96xf32> -> vector<2x96xf32>
    %426 = vector.broadcast %243 : vector<1x96xf32> to vector<2x96xf32>
    %427 = arith.addf %425, %426 : vector<2x96xf32>
    %428 = vector.extract_strided_slice %423 {offsets = [0, 0], sizes = [2, 64], strides = [1, 1]} : vector<2x96xf32> to vector<2x64xf32>
    %429 = vector.extract_strided_slice %427 {offsets = [0, 0], sizes = [2, 64], strides = [1, 1]} : vector<2x96xf32> to vector<2x64xf32>
    %430 = arith.addf %428, %429 : vector<2x64xf32>
    %431 = arith.negf %430 : vector<2x64xf32>
    %432 = math.exp %431 : vector<2x64xf32>
    %cst_55 = arith.constant 1.000000e+00 : f32
    %433 = vector.broadcast %cst_55 : f32 to vector<2x64xf32>
    %434 = arith.addf %433, %432 : vector<2x64xf32>
    %435 = arith.divf %433, %434 : vector<2x64xf32>
    %436 = vector.extract_strided_slice %435 {offsets = [0, 0], sizes = [2, 32], strides = [1, 1]} : vector<2x64xf32> to vector<2x32xf32>
    %437 = vector.extract_strided_slice %435 {offsets = [0, 32], sizes = [2, 32], strides = [1, 1]} : vector<2x64xf32> to vector<2x32xf32>
    %438 = vector.extract_strided_slice %423 {offsets = [0, 64], sizes = [2, 32], strides = [1, 1]} : vector<2x96xf32> to vector<2x32xf32>
    %439 = vector.extract_strided_slice %427 {offsets = [0, 64], sizes = [2, 32], strides = [1, 1]} : vector<2x96xf32> to vector<2x32xf32>
    %440 = arith.mulf %436, %439 : vector<2x32xf32>
    %441 = arith.addf %438, %440 : vector<2x32xf32>
    %442 = math.tanh %441 : vector<2x32xf32>
    %cst_56 = arith.constant 1.000000e+00 : f32
    %443 = vector.broadcast %cst_56 : f32 to vector<2x32xf32>
    %444 = arith.subf %443, %437 : vector<2x32xf32>
    %445 = arith.mulf %444, %442 : vector<2x32xf32>
    %446 = arith.mulf %437, %422 : vector<2x32xf32>
    %447 = arith.addf %445, %446 : vector<2x32xf32>
    %448 = vector.extract_strided_slice %1 {offsets = [2, 0, 0], sizes = [1, 72, 96], strides = [1, 1, 1]} : vector<3x72x96xbf16> to vector<1x72x96xbf16>
    %449 = vector.shape_cast %448 : vector<1x72x96xbf16> to vector<72x96xbf16>
    %450 = arith.truncf %447 : vector<2x32xf32> to vector<2x32xbf16>
    %451 = vector.extract_strided_slice %449 {offsets = [0, 0], sizes = [32, 96], strides = [1, 1]} : vector<72x96xbf16> to vector<32x96xbf16>
    %cst_57 = arith.constant dense<0.000000e+00> : vector<2x96xf32>
    %452 = tpu.matmul %450, %451, %cst_57 {dimension_numbers = #tpu.dot_dimension_numbers<[1], [0], [0], [1], [0, 0, 1, 1], [], []>} : vector<2x32xbf16>, vector<32x96xbf16>, vector<2x96xf32> -> vector<2x96xf32>
    %453 = vector.extract_strided_slice %449 {offsets = [32, 0], sizes = [1, 96], strides = [1, 1]} : vector<72x96xbf16> to vector<1x96xbf16>
    %454 = arith.extf %453 : vector<1x96xbf16> to vector<1x96xf32>
    %455 = vector.broadcast %454 : vector<1x96xf32> to vector<2x96xf32>
    %456 = arith.addf %452, %455 : vector<2x96xf32>
    %457 = vector.extract_strided_slice %456 {offsets = [0, 0], sizes = [2, 10], strides = [1, 1]} : vector<2x96xf32> to vector<2x10xf32>
    %c0_58 = arith.constant 0 : index
    %c0_59 = arith.constant 0 : index
    %458 = vector.load %arg2[%c0_58, %c0_59] : memref<2x10xf32, #tpu.memory_space<vmem>>, vector<2x10xf32>
    tpu.vector_store %arg2[%c0_58, %c0_59], %457 {strides = array<i32>} : memref<2x10xf32, #tpu.memory_space<vmem>>, vector<2x10xf32>,
    return
  }
}

</mosaic_0001>

<llo_original>
// kernel: my_gru_forward.1
$region0: #{my_gru_forward.1}
  #allocation0 [shape = 'u32[]', space=smem, size = 0x4, offset = 0x4, fixed_abs, tag = 'smem constant byte address 0x4 - core index']
  #allocation1 [shape = 'u32[144,128]{1,0:T(1,128)}', space=vmem, size = 0x12000, scoped, tag = 'internal scratch']
  %s0 = inlined_call_operand.hbm [shape: f32[2,8,28], index: 0, kind: input, shape index: {}]
  %s1 = inlined_call_operand.hbm [shape: bf16[3,72,96], index: 1, kind: input, shape index: {}]
  %s2 = inlined_call_operand.hbm [shape: f32[2,10], index: 2, kind: output, shape index: {}]
  %s3 = sld [smem:[#allocation0]]
  $region26: #{my_gru_forward.1} parent=0
    _
  %s5 = ssub.s32 1, %s3
  %s6 = scalar_select 0, %s5, %s3
  $region1: #{my_gru_forward.1} parent=0
    #allocation2 [shape = 'u8[8192]{0}', space=vmem, size = 0x2000, scoped, tag = 'input window, operand 0, single buffered']
    #allocation3 [shape = 's32[1]{0}', space=sflag, size = 0x4, scoped, tag = 'scoped memory for my_gru_forward.1']
    #allocation4 [shape = 's32[1]{0}', space=sflag, size = 0x4, scoped, tag = 'scoped memory for my_gru_forward.1']
    #allocation5 [shape = 'u8[55296]{0}', space=vmem, size = 0xd800, scoped, tag = 'input window, operand 1, single buffered']
    #allocation6 [shape = 's32[1]{0}', space=sflag, size = 0x4, scoped, tag = 'scoped memory for my_gru_forward.1']
    #allocation7 [shape = 'u8[1024]{0}', space=vmem, size = 0x400, scoped, tag = 'output window, operand 0, single buffered']
    %7 = vsyncpa [#allocation3], 0
    %8 = vsyncpa [#allocation6], 0
    %9 = vsyncpa [#allocation4], 0
    // Predicated region
    $region2: #{my_gru_forward.1} parent=1 // pred_check
      _
    $region3: #{my_gru_forward.1} parent=1 // pred_check_branch
      %11 = sbr.rel (0) target = $region5
    $region4: #{my_gru_forward.1} parent=1 // pred_region
      %s13 = ssub.s32 256, 256
      %14 = vsyncadd [#allocation3], %s13
      %s15 = sshll.u32 [#allocation2], 4
      %s16 = int_to_ptr.vmem [resolvable:$true] %s15
      %21 = dma.hbm_to_vmem [thread:$0]  %s0, 256, %s16, [#allocation3], 128, 128, 8
    $region5: #{my_gru_forward.1} parent=1 // pred_fallthru
      _
    // Predicated region
    $region6: #{my_gru_forward.1} parent=1 // pred_check
      _
    $region7: #{my_gru_forward.1} parent=1 // pred_check_branch
      %23 = sbr.rel (0) target = $region9
    $region8: #{my_gru_forward.1} parent=1 // pred_region
      %s25 = ssub.s32 1728, 1728
      %26 = vsyncadd [#allocation6], %s25
      %s27 = sshll.u32 [#allocation5], 4
      %s28 = int_to_ptr.vmem [resolvable:$true] %s27
      %33 = dma.hbm_to_vmem [thread:$0]  %s1, 1728, %s28, [#allocation6], 64, 64, 4
    $region9: #{my_gru_forward.1} parent=1 // pred_fallthru
      _
    // Predicated region
    $region10: #{my_gru_forward.1} parent=1 // pred_check
      _
    $region11: #{my_gru_forward.1} parent=1 // pred_check_branch
      %35 = sbr.rel (0) target = $region13
    $region12: #{my_gru_forward.1} parent=1 // pred_region
      %36 = dma.done [#allocation3], 256
    $region13: #{my_gru_forward.1} parent=1 // pred_fallthru
      _
    // Predicated region
    $region14: #{my_gru_forward.1} parent=1 // pred_check
      _
    $region15: #{my_gru_forward.1} parent=1 // pred_check_branch
      %38 = sbr.rel (0) target = $region17
    $region16: #{my_gru_forward.1} parent=1 // pred_region
      %39 = dma.done [#allocation6], 1728
    $region17: #{my_gru_forward.1} parent=1 // pred_fallthru
      _
    %v41 = vld [vmem:[#allocation2] sm:$0xff]
    %v42 = vld [vmem:[#allocation2 + $0x8] sm:$0xff]
    %v43 = vld [vmem:[#allocation5] sm:$0xf]
    %v44 = vld [vmem:[#allocation5 + $0x4] sm:$0xf]
    %v45 = vld [vmem:[#allocation5 + $0x8] sm:$0xf]
    %v46 = vld [vmem:[#allocation5 + $0xc] sm:$0xf]
    %v47 = vld [vmem:[#allocation5 + $0x10] sm:$0xf]
    %v48 = vld [vmem:[#allocation5 + $0x14] sm:$0xf]
    %v49 = vld [vmem:[#allocation5 + $0x18] sm:$0xf]
    %v50 = vld [vmem:[#allocation5 + $0x1c] sm:$0xf]
    %v51 = vld [vmem:[#allocation5 + $0x20] sm:$0xf]
    %v52 = vld [vmem:[#allocation5 + $0x24] sm:$0xf]
    %v53 = vld [vmem:[#allocation5 + $0x28] sm:$0xf]
    %v54 = vld [vmem:[#allocation5 + $0x2c] sm:$0xf]
    %v55 = vld [vmem:[#allocation5 + $0x30] sm:$0xf]
    %v56 = vld [vmem:[#allocation5 + $0x34] sm:$0xf]
    %v57 = vld [vmem:[#allocation5 + $0x38] sm:$0xf]
    %v58 = vld [vmem:[#allocation5 + $0x3c] sm:$0xf]
    %v59 = vld [vmem:[#allocation5 + $0x40] sm:$0xf]
    %v60 = vld [vmem:[#allocation5 + $0x44] sm:$0xf]
    %v61 = vld [vmem:[#allocation5 + $0x48] sm:$0xf]
    %v62 = vld [vmem:[#allocation5 + $0x4c] sm:$0xf]
    %v63 = vld [vmem:[#allocation5 + $0x50] sm:$0xf]
    %v64 = vld [vmem:[#allocation5 + $0x54] sm:$0xf]
    %v65 = vld [vmem:[#allocation5 + $0x58] sm:$0xf]
    %v66 = vpack.c.bf16 %v42, %v41
    %vm67 = vcmask 228352
    %v70 = vsel %vm67, %v66, 0
    %v71 = vunpack.c.l.bf16 %v51
    %v72 = vlaneseq
    %v73 = vshrl.u32 %v72, 7
    %v74 = vsub.s32 0, %v73
    %v75 = vrot.slane %v71, %v74
    %v80 = vunpack.c.l.b16 %v43
    %v81 = vunpack.c.l.b16 %v44
    %v82 = vunpack.c.l.b16 %v45
    %v83 = vunpack.c.l.b16 %v46
    %v84 = vpack.c.b16 %v81, %v80
    %v85 = vpack.c.b16 %v83, %v82
    %vm88 = vcmask 261120
    %v89 = vsel %vm88, %v70, 0
    %91 = vmatprep.subr.bf16.mxu0 0
    %92 = vmatpush1.bf16.msra.mxu0 %v84
    %93 = vmatprep.subr.bf16.mxu0 0
    %94 = vmatpush1.bf16.msra.mxu0 %v85
    %95 = vmatprep.subr.bf16.mxu0 0
    %96 = vmatpush1.bf16.msra.mxu0 0
    %97 = vmatprep.subr.bf16.mxu0 0
    %98 = vmatpush1.bf16.msra.mxu0 0
    %99 = vmatprep.subr.bf16.mxu0 0
    %100 = vmatpush1.bf16.msra.mxu0 0
    %101 = vmatprep.subr.bf16.mxu0 0
    %102 = vmatpush1.bf16.msra.mxu0 0
    %103 = vmatprep.subr.bf16.mxu0 0
    %104 = vmatpush1.bf16.msra.mxu0 0
    %105 = vmatprep.subr.bf16.mxu0 0
    %106 = vmatpush1.bf16.msra.mxu0 0
    %107 = vmatprep.subr.bf16.mxu0 0
    %108 = vmatpush1.bf16.msra.mxu0 0
    %109 = vmatprep.subr.bf16.mxu0 0
    %110 = vmatpush1.bf16.msra.mxu0 0
    %111 = vmatprep.subr.bf16.mxu0 0
    %112 = vmatpush1.bf16.msra.mxu0 0
    %113 = vmatprep.subr.bf16.mxu0 0
    %114 = vmatpush1.bf16.msra.mxu0 0
    %115 = vmatprep.subr.bf16.mxu0 0
    %116 = vmatpush1.bf16.msra.mxu0 0
    %117 = vmatprep.subr.bf16.mxu0 0
    %118 = vmatpush1.bf16.msra.mxu0 0
    %119 = vmatprep.subr.bf16.mxu0 0
    %120 = vmatpush1.bf16.msra.mxu0 0
    %121 = vmatprep.subr.bf16.mxu0 0
    %122 = vmatpush1.bf16.msra.mxu0 0
    %123 = vmatprep.mubr.bf16.mxu0 0
    %124 = vmatmul.mubr.bf16.gmra.mrb[0].mxu0 %v89
    %v125 = vpop.f32.mrb[0].mxu0
    %v126 = vadd.f32 %v75, %v125
    %v127 = vpop.f32.mrb[0].mxu0
    %v128 = vpop.f32.mrb[0].mxu0
    %v129 = vadd.f32 %v75, %v128
    %v130 = vpop.f32.mrb[0].mxu0
    %131 = vdwg.mxu0
    %v133 = vrot.slane %v129, 7
    %vm135 = vcmask 1040384
    %v136 = vsel %vm135, %v126, %v133
    %v137 = vlaneseq
    %v138 = vshrl.u32 %v137, 7
    %v139 = vsub.s32 1, %v138
    %v140 = vrot.slane %v71, %v139
    %v145 = vunpack.c.l.b16 %v47
    %v146 = vunpack.c.l.b16 %v48
    %v147 = vunpack.c.l.b16 %v49
    %v148 = vunpack.c.l.b16 %v50
    %v149 = vpack.c.b16 %v146, %v145
    %v150 = vpack.c.b16 %v148, %v147
    %v153 = vsel %vm88, 0, 0
    %155 = vmatprep.subr.bf16.mxu0 0
    %156 = vmatpush1.bf16.msra.mxu0 %v149
    %157 = vmatprep.subr.bf16.mxu0 0
    %158 = vmatpush1.bf16.msra.mxu0 %v150
    %159 = vmatprep.subr.bf16.mxu0 0
    %160 = vmatpush1.bf16.msra.mxu0 0
    %161 = vmatprep.subr.bf16.mxu0 0
    %162 = vmatpush1.bf16.msra.mxu0 0
    %163 = vmatprep.subr.bf16.mxu0 0
    %164 = vmatpush1.bf16.msra.mxu0 0
    %165 = vmatprep.subr.bf16.mxu0 0
    %166 = vmatpush1.bf16.msra.mxu0 0
    %167 = vmatprep.subr.bf16.mxu0 0
    %168 = vmatpush1.bf16.msra.mxu0 0
    %169 = vmatprep.subr.bf16.mxu0 0
    %170 = vmatpush1.bf16.msra.mxu0 0
    %171 = vmatprep.subr.bf16.mxu0 0
    %172 = vmatpush1.bf16.msra.mxu0 0
    %173 = vmatprep.subr.bf16.mxu0 0
    %174 = vmatpush1.bf16.msra.mxu0 0
    %175 = vmatprep.subr.bf16.mxu0 0
    %176 = vmatpush1.bf16.msra.mxu0 0
    %177 = vmatprep.subr.bf16.mxu0 0
    %178 = vmatpush1.bf16.msra.mxu0 0
    %179 = vmatprep.subr.bf16.mxu0 0
    %180 = vmatpush1.bf16.msra.mxu0 0
    %181 = vmatprep.subr.bf16.mxu0 0
    %182 = vmatpush1.bf16.msra.mxu0 0
    %183 = vmatprep.subr.bf16.mxu0 0
    %184 = vmatpush1.bf16.msra.mxu0 0
    %185 = vmatprep.subr.bf16.mxu0 0
    %186 = vmatpush1.bf16.msra.mxu0 0
    %187 = vmatprep.mubr.bf16.mxu0 0
    %188 = vmatmul.mubr.bf16.gmra.mrb[0].mxu0 %v153
    %v189 = vpop.f32.mrb[0].mxu0
    %v190 = vadd.f32 %v140, %v189
    %v191 = vpop.f32.mrb[0].mxu0
    %v192 = vpop.f32.mrb[0].mxu0
    %v193 = vpop.f32.mrb[0].mxu0
    %194 = vdwg.mxu0
    %v195 = vadd.f32 %v136, %v190
    %v196 = vxor.u32 %v195, 2147483648
    %v197 = vmul.f32 %v196, 1.442695
    %v198 = vpow.pop %v197
    %v199 = vadd.f32 %v198, 1.0
    %v200 = vrcp.pop %v199
    %v201 = vmul.f32 1.0, %v200
    %203 = vrot.lane.b32.xlu0 %v190, 64
    %v204 = vpop.permute.xlu0 %203
    %v206 = vmul.f32 %v201, %v204
    %208 = vrot.lane.b32.xlu0 %v206, 64
    %v209 = vpop.permute.xlu0 %208
    %v211 = vadd.f32 %v136, %v209
    %v212 = vtanh.pop %v211
    %v213 = vsub.f32 1.0, %v201
    %215 = vrot.lane.b32.xlu0 %v212, 96
    %v216 = vpop.permute.xlu0 %215
    %v218 = vmul.f32 %v213, %v216
    %v219 = vmul.f32 %v201, 0.0
    %v220 = vadd.f32 %v218, %v219
    %v222 = vrot.slane %v126, 1
    %v224 = vsel %vm135, %v222, %v129
    %v225 = vpack.c.bf16 %v220, %v220
    %227 = vrot.lane.b32.xlu0 %v225, 96
    %v228 = vpop.permute.xlu0 %227
    %v230 = vsel %vm88, %v228, 0
    %232 = vmatprep.subr.bf16.mxu0 0
    %233 = vmatpush1.bf16.msra.mxu0 %v149
    %234 = vmatprep.subr.bf16.mxu0 0
    %235 = vmatpush1.bf16.msra.mxu0 %v150
    %236 = vmatprep.subr.bf16.mxu0 0
    %237 = vmatpush1.bf16.msra.mxu0 0
    %238 = vmatprep.subr.bf16.mxu0 0
    %239 = vmatpush1.bf16.msra.mxu0 0
    %240 = vmatprep.subr.bf16.mxu0 0
    %241 = vmatpush1.bf16.msra.mxu0 0
    %242 = vmatprep.subr.bf16.mxu0 0
    %243 = vmatpush1.bf16.msra.mxu0 0
    %244 = vmatprep.subr.bf16.mxu0 0
    %245 = vmatpush1.bf16.msra.mxu0 0
    %246 = vmatprep.subr.bf16.mxu0 0
    %247 = vmatpush1.bf16.msra.mxu0 0
    %248 = vmatprep.subr.bf16.mxu0 0
    %249 = vmatpush1.bf16.msra.mxu0 0
    %250 = vmatprep.subr.bf16.mxu0 0
    %251 = vmatpush1.bf16.msra.mxu0 0
    %252 = vmatprep.subr.bf16.mxu0 0
    %253 = vmatpush1.bf16.msra.mxu0 0
    %254 = vmatprep.subr.bf16.mxu0 0
    %255 = vmatpush1.bf16.msra.mxu0 0
    %256 = vmatprep.subr.bf16.mxu0 0
    %257 = vmatpush1.bf16.msra.mxu0 0
    %258 = vmatprep.subr.bf16.mxu0 0
    %259 = vmatpush1.bf16.msra.mxu0 0
    %260 = vmatprep.subr.bf16.mxu0 0
    %261 = vmatpush1.bf16.msra.mxu0 0
    %262 = vmatprep.subr.bf16.mxu0 0
    %263 = vmatpush1.bf16.msra.mxu0 0
    %264 = vmatprep.mubr.bf16.mxu0 0
    %265 = vmatmul.mubr.bf16.gmra.mrb[0].mxu0 %v230
    %v266 = vpop.f32.mrb[0].mxu0
    %v267 = vadd.f32 %v140, %v266
    %v268 = vpop.f32.mrb[0].mxu0
    %v269 = vpop.f32.mrb[0].mxu0
    %v270 = vpop.f32.mrb[0].mxu0
    %271 = vdwg.mxu0
    %v272 = vadd.f32 %v224, %v267
    %v273 = vxor.u32 %v272, 2147483648
    %v274 = vmul.f32 %v273, 1.442695
    %v275 = vpow.pop %v274
    %v276 = vadd.f32 %v275, 1.0
    %v277 = vrcp.pop %v276
    %v278 = vmul.f32 1.0, %v277
    %280 = vrot.lane.b32.xlu0 %v267, 64
    %v281 = vpop.permute.xlu0 %280
    %v283 = vmul.f32 %v278, %v281
    %285 = vrot.lane.b32.xlu0 %v283, 64
    %v286 = vpop.permute.xlu0 %285
    %v288 = vadd.f32 %v224, %v286
    %v289 = vtanh.pop %v288
    %v290 = vsub.f32 1.0, %v278
    %292 = vrot.lane.b32.xlu0 %v289, 96
    %v293 = vpop.permute.xlu0 %292
    %v295 = vmul.f32 %v290, %v293
    %v296 = vmul.f32 %v278, %v220
    %v297 = vadd.f32 %v295, %v296
    %v298 = vrot.slane %v126, 2
    %v300 = vrot.slane %v129, 1
    %v302 = vsel %vm135, %v298, %v300
    %v303 = vpack.c.bf16 %v297, %v297
    %305 = vrot.lane.b32.xlu0 %v303, 96
    %v306 = vpop.permute.xlu0 %305
    %v308 = vsel %vm88, %v306, 0
    %310 = vmatprep.subr.bf16.mxu0 0
    %311 = vmatpush1.bf16.msra.mxu0 %v149
    %312 = vmatprep.subr.bf16.mxu0 0
    %313 = vmatpush1.bf16.msra.mxu0 %v150
    %314 = vmatprep.subr.bf16.mxu0 0
    %315 = vmatpush1.bf16.msra.mxu0 0
    %316 = vmatprep.subr.bf16.mxu0 0
    %317 = vmatpush1.bf16.msra.mxu0 0
    %318 = vmatprep.subr.bf16.mxu0 0
    %319 = vmatpush1.bf16.msra.mxu0 0
    %320 = vmatprep.subr.bf16.mxu0 0
    %321 = vmatpush1.bf16.msra.mxu0 0
    %322 = vmatprep.subr.bf16.mxu0 0
    %323 = vmatpush1.bf16.msra.mxu0 0
    %324 = vmatprep.subr.bf16.mxu0 0
    %325 = vmatpush1.bf16.msra.mxu0 0
    %326 = vmatprep.subr.bf16.mxu0 0
    %327 = vmatpush1.bf16.msra.mxu0 0
    %328 = vmatprep.subr.bf16.mxu0 0
    %329 = vmatpush1.bf16.msra.mxu0 0
    %330 = vmatprep.subr.bf16.mxu0 0
    %331 = vmatpush1.bf16.msra.mxu0 0
    %332 = vmatprep.subr.bf16.mxu0 0
    %333 = vmatpush1.bf16.msra.mxu0 0
    %334 = vmatprep.subr.bf16.mxu0 0
    %335 = vmatpush1.bf16.msra.mxu0 0
    %336 = vmatprep.subr.bf16.mxu0 0
    %337 = vmatpush1.bf16.msra.mxu0 0
    %338 = vmatprep.subr.bf16.mxu0 0
    %339 = vmatpush1.bf16.msra.mxu0 0
    %340 = vmatprep.subr.bf16.mxu0 0
    %341 = vmatpush1.bf16.msra.mxu0 0
    %342 = vmatprep.mubr.bf16.mxu0 0
    %343 = vmatmul.mubr.bf16.gmra.mrb[0].mxu0 %v308
    %v344 = vpop.f32.mrb[0].mxu0
    %v345 = vadd.f32 %v140, %v344
    %v346 = vpop.f32.mrb[0].mxu0
    %v347 = vpop.f32.mrb[0].mxu0
    %v348 = vpop.f32.mrb[0].mxu0
    %349 = vdwg.mxu0
    %v350 = vadd.f32 %v302, %v345
    %v351 = vxor.u32 %v350, 2147483648
    %v352 = vmul.f32 %v351, 1.442695
    %v353 = vpow.pop %v352
    %v354 = vadd.f32 %v353, 1.0
    %v355 = vrcp.pop %v354
    %v356 = vmul.f32 1.0, %v355
    %358 = vrot.lane.b32.xlu0 %v345, 64
    %v359 = vpop.permute.xlu0 %358
    %v361 = vmul.f32 %v356, %v359
    %363 = vrot.lane.b32.xlu0 %v361, 64
    %v364 = vpop.permute.xlu0 %363
    %v366 = vadd.f32 %v302, %v364
    %v367 = vtanh.pop %v366
    %v368 = vsub.f32 1.0, %v356
    %370 = vrot.lane.b32.xlu0 %v367, 96
    %v371 = vpop.permute.xlu0 %370
    %v373 = vmul.f32 %v368, %v371
    %v374 = vmul.f32 %v356, %v297
    %v375 = vadd.f32 %v373, %v374
    %v376 = vrot.slane %v126, 3
    %v378 = vrot.slane %v129, 2
    %v380 = vsel %vm135, %v376, %v378
    %v381 = vpack.c.bf16 %v375, %v375
    %383 = vrot.lane.b32.xlu0 %v381, 96
    %v384 = vpop.permute.xlu0 %383
    %v386 = vsel %vm88, %v384, 0
    %388 = vmatprep.subr.bf16.mxu0 0
    %389 = vmatpush1.bf16.msra.mxu0 %v149
    %390 = vmatprep.subr.bf16.mxu0 0
    %391 = vmatpush1.bf16.msra.mxu0 %v150
    %392 = vmatprep.subr.bf16.mxu0 0
    %393 = vmatpush1.bf16.msra.mxu0 0
    %394 = vmatprep.subr.bf16.mxu0 0
    %395 = vmatpush1.bf16.msra.mxu0 0
    %396 = vmatprep.subr.bf16.mxu0 0
    %397 = vmatpush1.bf16.msra.mxu0 0
    %398 = vmatprep.subr.bf16.mxu0 0
    %399 = vmatpush1.bf16.msra.mxu0 0
    %400 = vmatprep.subr.bf16.mxu0 0
    %401 = vmatpush1.bf16.msra.mxu0 0
    %402 = vmatprep.subr.bf16.mxu0 0
    %403 = vmatpush1.bf16.msra.mxu0 0
    %404 = vmatprep.subr.bf16.mxu0 0
    %405 = vmatpush1.bf16.msra.mxu0 0
    %406 = vmatprep.subr.bf16.mxu0 0
    %407 = vmatpush1.bf16.msra.mxu0 0
    %408 = vmatprep.subr.bf16.mxu0 0
    %409 = vmatpush1.bf16.msra.mxu0 0
    %410 = vmatprep.subr.bf16.mxu0 0
    %411 = vmatpush1.bf16.msra.mxu0 0
    %412 = vmatprep.subr.bf16.mxu0 0
    %413 = vmatpush1.bf16.msra.mxu0 0
    %414 = vmatprep.subr.bf16.mxu0 0
    %415 = vmatpush1.bf16.msra.mxu0 0
    %416 = vmatprep.subr.bf16.mxu0 0
    %417 = vmatpush1.bf16.msra.mxu0 0
    %418 = vmatprep.subr.bf16.mxu0 0
    %419 = vmatpush1.bf16.msra.mxu0 0
    %420 = vmatprep.mubr.bf16.mxu0 0
    %421 = vmatmul.mubr.bf16.gmra.mrb[0].mxu0 %v386
    %v422 = vpop.f32.mrb[0].mxu0
    %v423 = vadd.f32 %v140, %v422
    %v424 = vpop.f32.mrb[0].mxu0
    %v425 = vpop.f32.mrb[0].mxu0
    %v426 = vpop.f32.mrb[0].mxu0
    %427 = vdwg.mxu0
    %v428 = vadd.f32 %v380, %v423
    %v429 = vxor.u32 %v428, 2147483648
    %v430 = vmul.f32 %v429, 1.442695
    %v431 = vpow.pop %v430
    %v432 = vadd.f32 %v431, 1.0
    %v433 = vrcp.pop %v432
    %v434 = vmul.f32 1.0, %v433
    %436 = vrot.lane.b32.xlu0 %v423, 64
    %v437 = vpop.permute.xlu0 %436
    %v439 = vmul.f32 %v434, %v437
    %441 = vrot.lane.b32.xlu0 %v439, 64
    %v442 = vpop.permute.xlu0 %441
    %v444 = vadd.f32 %v380, %v442
    %v445 = vtanh.pop %v444
    %v446 = vsub.f32 1.0, %v434
    %448 = vrot.lane.b32.xlu0 %v445, 96
    %v449 = vpop.permute.xlu0 %448
    %v451 = vmul.f32 %v446, %v449
    %v452 = vmul.f32 %v434, %v375
    %v453 = vadd.f32 %v451, %v452
    %v454 = vrot.slane %v126, 4
    %v456 = vrot.slane %v129, 3
    %v458 = vsel %vm135, %v454, %v456
    %v459 = vpack.c.bf16 %v453, %v453
    %461 = vrot.lane.b32.xlu0 %v459, 96
    %v462 = vpop.permute.xlu0 %461
    %v464 = vsel %vm88, %v462, 0
    %466 = vmatprep.subr.bf16.mxu0 0
    %467 = vmatpush1.bf16.msra.mxu0 %v149
    %468 = vmatprep.subr.bf16.mxu0 0
    %469 = vmatpush1.bf16.msra.mxu0 %v150
    %470 = vmatprep.subr.bf16.mxu0 0
    %471 = vmatpush1.bf16.msra.mxu0 0
    %472 = vmatprep.subr.bf16.mxu0 0
    %473 = vmatpush1.bf16.msra.mxu0 0
    %474 = vmatprep.subr.bf16.mxu0 0
    %475 = vmatpush1.bf16.msra.mxu0 0
    %476 = vmatprep.subr.bf16.mxu0 0
    %477 = vmatpush1.bf16.msra.mxu0 0
    %478 = vmatprep.subr.bf16.mxu0 0
    %479 = vmatpush1.bf16.msra.mxu0 0
    %480 = vmatprep.subr.bf16.mxu0 0
    %481 = vmatpush1.bf16.msra.mxu0 0
    %482 = vmatprep.subr.bf16.mxu0 0
    %483 = vmatpush1.bf16.msra.mxu0 0
    %484 = vmatprep.subr.bf16.mxu0 0
    %485 = vmatpush1.bf16.msra.mxu0 0
    %486 = vmatprep.subr.bf16.mxu0 0
    %487 = vmatpush1.bf16.msra.mxu0 0
    %488 = vmatprep.subr.bf16.mxu0 0
    %489 = vmatpush1.bf16.msra.mxu0 0
    %490 = vmatprep.subr.bf16.mxu0 0
    %491 = vmatpush1.bf16.msra.mxu0 0
    %492 = vmatprep.subr.bf16.mxu0 0
    %493 = vmatpush1.bf16.msra.mxu0 0
    %494 = vmatprep.subr.bf16.mxu0 0
    %495 = vmatpush1.bf16.msra.mxu0 0
    %496 = vmatprep.subr.bf16.mxu0 0
    %497 = vmatpush1.bf16.msra.mxu0 0
    %498 = vmatprep.mubr.bf16.mxu0 0
    %499 = vmatmul.mubr.bf16.gmra.mrb[0].mxu0 %v464
    %v500 = vpop.f32.mrb[0].mxu0
    %v501 = vadd.f32 %v140, %v500
    %v502 = vpop.f32.mrb[0].mxu0
    %v503 = vpop.f32.mrb[0].mxu0
    %v504 = vpop.f32.mrb[0].mxu0
    %505 = vdwg.mxu0
    %v506 = vadd.f32 %v458, %v501
    %v507 = vxor.u32 %v506, 2147483648
    %v508 = vmul.f32 %v507, 1.442695
    %v509 = vpow.pop %v508
    %v510 = vadd.f32 %v509, 1.0
    %v511 = vrcp.pop %v510
    %v512 = vmul.f32 1.0, %v511
    %514 = vrot.lane.b32.xlu0 %v501, 64
    %v515 = vpop.permute.xlu0 %514
    %v517 = vmul.f32 %v512, %v515
    %519 = vrot.lane.b32.xlu0 %v517, 64
    %v520 = vpop.permute.xlu0 %519
    %v522 = vadd.f32 %v458, %v520
    %v523 = vtanh.pop %v522
    %v524 = vsub.f32 1.0, %v512
    %526 = vrot.lane.b32.xlu0 %v523, 96
    %v527 = vpop.permute.xlu0 %526
    %v529 = vmul.f32 %v524, %v527
    %v530 = vmul.f32 %v512, %v453
    %v531 = vadd.f32 %v529, %v530
    %v532 = vrot.slane %v126, 5
    %v534 = vrot.slane %v129, 4
    %v536 = vsel %vm135, %v532, %v534
    %v537 = vpack.c.bf16 %v531, %v531
    %539 = vrot.lane.b32.xlu0 %v537, 96
    %v540 = vpop.permute.xlu0 %539
    %v542 = vsel %vm88, %v540, 0
    %544 = vmatprep.subr.bf16.mxu0 0
    %545 = vmatpush1.bf16.msra.mxu0 %v149
    %546 = vmatprep.subr.bf16.mxu0 0
    %547 = vmatpush1.bf16.msra.mxu0 %v150
    %548 = vmatprep.subr.bf16.mxu0 0
    %549 = vmatpush1.bf16.msra.mxu0 0
    %550 = vmatprep.subr.bf16.mxu0 0
    %551 = vmatpush1.bf16.msra.mxu0 0
    %552 = vmatprep.subr.bf16.mxu0 0
    %553 = vmatpush1.bf16.msra.mxu0 0
    %554 = vmatprep.subr.bf16.mxu0 0
    %555 = vmatpush1.bf16.msra.mxu0 0
    %556 = vmatprep.subr.bf16.mxu0 0
    %557 = vmatpush1.bf16.msra.mxu0 0
    %558 = vmatprep.subr.bf16.mxu0 0
    %559 = vmatpush1.bf16.msra.mxu0 0
    %560 = vmatprep.subr.bf16.mxu0 0
    %561 = vmatpush1.bf16.msra.mxu0 0
    %562 = vmatprep.subr.bf16.mxu0 0
    %563 = vmatpush1.bf16.msra.mxu0 0
    %564 = vmatprep.subr.bf16.mxu0 0
    %565 = vmatpush1.bf16.msra.mxu0 0
    %566 = vmatprep.subr.bf16.mxu0 0
    %567 = vmatpush1.bf16.msra.mxu0 0
    %568 = vmatprep.subr.bf16.mxu0 0
    %569 = vmatpush1.bf16.msra.mxu0 0
    %570 = vmatprep.subr.bf16.mxu0 0
    %571 = vmatpush1.bf16.msra.mxu0 0
    %572 = vmatprep.subr.bf16.mxu0 0
    %573 = vmatpush1.bf16.msra.mxu0 0
    %574 = vmatprep.subr.bf16.mxu0 0
    %575 = vmatpush1.bf16.msra.mxu0 0
    %576 = vmatprep.mubr.bf16.mxu0 0
    %577 = vmatmul.mubr.bf16.gmra.mrb[0].mxu0 %v542
    %v578 = vpop.f32.mrb[0].mxu0
    %v579 = vadd.f32 %v140, %v578
    %v580 = vpop.f32.mrb[0].mxu0
    %v581 = vpop.f32.mrb[0].mxu0
    %v582 = vpop.f32.mrb[0].mxu0
    %583 = vdwg.mxu0
    %v584 = vadd.f32 %v536, %v579
    %v585 = vxor.u32 %v584, 2147483648
    %v586 = vmul.f32 %v585, 1.442695
    %v587 = vpow.pop %v586
    %v588 = vadd.f32 %v587, 1.0
    %v589 = vrcp.pop %v588
    %v590 = vmul.f32 1.0, %v589
    %592 = vrot.lane.b32.xlu0 %v579, 64
    %v593 = vpop.permute.xlu0 %592
    %v595 = vmul.f32 %v590, %v593
    %597 = vrot.lane.b32.xlu0 %v595, 64
    %v598 = vpop.permute.xlu0 %597
    %v600 = vadd.f32 %v536, %v598
    %v601 = vtanh.pop %v600
    %v602 = vsub.f32 1.0, %v590
    %604 = vrot.lane.b32.xlu0 %v601, 96
    %v605 = vpop.permute.xlu0 %604
    %v607 = vmul.f32 %v602, %v605
    %v608 = vmul.f32 %v590, %v531
    %v609 = vadd.f32 %v607, %v608
    %v610 = vrot.slane %v126, 6
    %v612 = vrot.slane %v129, 5
    %v614 = vsel %vm135, %v610, %v612
    %v615 = vpack.c.bf16 %v609, %v609
    %617 = vrot.lane.b32.xlu0 %v615, 96
    %v618 = vpop.permute.xlu0 %617
    %v620 = vsel %vm88, %v618, 0
    %622 = vmatprep.subr.bf16.mxu0 0
    %623 = vmatpush1.bf16.msra.mxu0 %v149
    %624 = vmatprep.subr.bf16.mxu0 0
    %625 = vmatpush1.bf16.msra.mxu0 %v150
    %626 = vmatprep.subr.bf16.mxu0 0
    %627 = vmatpush1.bf16.msra.mxu0 0
    %628 = vmatprep.subr.bf16.mxu0 0
    %629 = vmatpush1.bf16.msra.mxu0 0
    %630 = vmatprep.subr.bf16.mxu0 0
    %631 = vmatpush1.bf16.msra.mxu0 0
    %632 = vmatprep.subr.bf16.mxu0 0
    %633 = vmatpush1.bf16.msra.mxu0 0
    %634 = vmatprep.subr.bf16.mxu0 0
    %635 = vmatpush1.bf16.msra.mxu0 0
    %636 = vmatprep.subr.bf16.mxu0 0
    %637 = vmatpush1.bf16.msra.mxu0 0
    %638 = vmatprep.subr.bf16.mxu0 0
    %639 = vmatpush1.bf16.msra.mxu0 0
    %640 = vmatprep.subr.bf16.mxu0 0
    %641 = vmatpush1.bf16.msra.mxu0 0
    %642 = vmatprep.subr.bf16.mxu0 0
    %643 = vmatpush1.bf16.msra.mxu0 0
    %644 = vmatprep.subr.bf16.mxu0 0
    %645 = vmatpush1.bf16.msra.mxu0 0
    %646 = vmatprep.subr.bf16.mxu0 0
    %647 = vmatpush1.bf16.msra.mxu0 0
    %648 = vmatprep.subr.bf16.mxu0 0
    %649 = vmatpush1.bf16.msra.mxu0 0
    %650 = vmatprep.subr.bf16.mxu0 0
    %651 = vmatpush1.bf16.msra.mxu0 0
    %652 = vmatprep.subr.bf16.mxu0 0
    %653 = vmatpush1.bf16.msra.mxu0 0
    %654 = vmatprep.mubr.bf16.mxu0 0
    %655 = vmatmul.mubr.bf16.gmra.mrb[0].mxu0 %v620
    %v656 = vpop.f32.mrb[0].mxu0
    %v657 = vadd.f32 %v140, %v656
    %v658 = vpop.f32.mrb[0].mxu0
    %v659 = vpop.f32.mrb[0].mxu0
    %v660 = vpop.f32.mrb[0].mxu0
    %661 = vdwg.mxu0
    %v662 = vadd.f32 %v614, %v657
    %v663 = vxor.u32 %v662, 2147483648
    %v664 = vmul.f32 %v663, 1.442695
    %v665 = vpow.pop %v664
    %v666 = vadd.f32 %v665, 1.0
    %v667 = vrcp.pop %v666
    %v668 = vmul.f32 1.0, %v667
    %670 = vrot.lane.b32.xlu0 %v657, 64
    %v671 = vpop.permute.xlu0 %670
    %v673 = vmul.f32 %v668, %v671
    %675 = vrot.lane.b32.xlu0 %v673, 64
    %v676 = vpop.permute.xlu0 %675
    %v678 = vadd.f32 %v614, %v676
    %v679 = vtanh.pop %v678
    %v680 = vsub.f32 1.0, %v668
    %682 = vrot.lane.b32.xlu0 %v679, 96
    %v683 = vpop.permute.xlu0 %682
    %v685 = vmul.f32 %v680, %v683
    %v686 = vmul.f32 %v668, %v609
    %v687 = vadd.f32 %v685, %v686
    %v688 = vrot.slane %v126, 7
    %v690 = vrot.slane %v129, 6
    %v692 = vsel %vm135, %v688, %v690
    %v693 = vpack.c.bf16 %v687, %v687
    %695 = vrot.lane.b32.xlu0 %v693, 96
    %v696 = vpop.permute.xlu0 %695
    %v698 = vsel %vm88, %v696, 0
    %700 = vmatprep.subr.bf16.mxu0 0
    %701 = vmatpush1.bf16.msra.mxu0 %v149
    %702 = vmatprep.subr.bf16.mxu0 0
    %703 = vmatpush1.bf16.msra.mxu0 %v150
    %704 = vmatprep.subr.bf16.mxu0 0
    %705 = vmatpush1.bf16.msra.mxu0 0
    %706 = vmatprep.subr.bf16.mxu0 0
    %707 = vmatpush1.bf16.msra.mxu0 0
    %708 = vmatprep.subr.bf16.mxu0 0
    %709 = vmatpush1.bf16.msra.mxu0 0
    %710 = vmatprep.subr.bf16.mxu0 0
    %711 = vmatpush1.bf16.msra.mxu0 0
    %712 = vmatprep.subr.bf16.mxu0 0
    %713 = vmatpush1.bf16.msra.mxu0 0
    %714 = vmatprep.subr.bf16.mxu0 0
    %715 = vmatpush1.bf16.msra.mxu0 0
    %716 = vmatprep.subr.bf16.mxu0 0
    %717 = vmatpush1.bf16.msra.mxu0 0
    %718 = vmatprep.subr.bf16.mxu0 0
    %719 = vmatpush1.bf16.msra.mxu0 0
    %720 = vmatprep.subr.bf16.mxu0 0
    %721 = vmatpush1.bf16.msra.mxu0 0
    %722 = vmatprep.subr.bf16.mxu0 0
    %723 = vmatpush1.bf16.msra.mxu0 0
    %724 = vmatprep.subr.bf16.mxu0 0
    %725 = vmatpush1.bf16.msra.mxu0 0
    %726 = vmatprep.subr.bf16.mxu0 0
    %727 = vmatpush1.bf16.msra.mxu0 0
    %728 = vmatprep.subr.bf16.mxu0 0
    %729 = vmatpush1.bf16.msra.mxu0 0
    %730 = vmatprep.subr.bf16.mxu0 0
    %731 = vmatpush1.bf16.msra.mxu0 0
    %732 = vmatprep.mubr.bf16.mxu0 0
    %733 = vmatmul.mubr.bf16.gmra.mrb[0].mxu0 %v698
    %v734 = vpop.f32.mrb[0].mxu0
    %v735 = vadd.f32 %v140, %v734
    %v736 = vpop.f32.mrb[0].mxu0
    %v737 = vpop.f32.mrb[0].mxu0
    %v738 = vpop.f32.mrb[0].mxu0
    %739 = vdwg.mxu0
    %v740 = vadd.f32 %v692, %v735
    %v741 = vxor.u32 %v740, 2147483648
    %v742 = vmul.f32 %v741, 1.442695
    %v743 = vpow.pop %v742
    %v744 = vadd.f32 %v743, 1.0
    %v745 = vrcp.pop %v744
    %v746 = vmul.f32 1.0, %v745
    %748 = vrot.lane.b32.xlu0 %v735, 64
    %v749 = vpop.permute.xlu0 %748
    %v751 = vmul.f32 %v746, %v749
    %753 = vrot.lane.b32.xlu0 %v751, 64
    %v754 = vpop.permute.xlu0 %753
    %v756 = vadd.f32 %v692, %v754
    %v757 = vtanh.pop %v756
    %v758 = vsub.f32 1.0, %v746
    %760 = vrot.lane.b32.xlu0 %v757, 96
    %v761 = vpop.permute.xlu0 %760
    %v763 = vmul.f32 %v758, %v761
    %v764 = vmul.f32 %v746, %v687
    %v765 = vadd.f32 %v763, %v764
    %v767 = vrot.slane %v297, 6
    %v770 = vrot.slane %v375, 4
    %v773 = vrot.slane %v453, 2
    %v776 = vrot.slane %v609, 6
    %v779 = vrot.slane %v687, 4
    %v782 = vrot.slane %v765, 2
    %vm784 = vcmask 1041408
    %v785 = vsel %vm784, %v220, %v767
    %vm786 = vcmask 1043456
    %v787 = vsel %vm786, %v785, %v770
    %vm788 = vcmask 1045504
    %v789 = vsel %vm788, %v787, %v773
    %v790 = vsel %vm784, %v531, %v776
    %v791 = vsel %vm786, %v790, %v779
    %v792 = vsel %vm788, %v791, %v782
    %v793 = vpack.c.bf16 %v792, %v789
    %v794 = vunpack.c.l.bf16 %v60
    %v795 = vlaneseq
    %v796 = vshrl.u32 %v795, 7
    %v797 = vsub.s32 0, %v796
    %v798 = vrot.slane %v794, %v797
    %800 = vrot.lane.b32.xlu0 %v793, 96
    %v801 = vpop.permute.xlu0 %800
    %v806 = vunpack.c.l.b16 %v52
    %v807 = vunpack.c.l.b16 %v53
    %v808 = vunpack.c.l.b16 %v54
    %v809 = vunpack.c.l.b16 %v55
    %v810 = vpack.c.b16 %v807, %v806
    %v811 = vpack.c.b16 %v809, %v808
    %v815 = vsel %vm88, %v801, 0
    %817 = vmatprep.subr.bf16.mxu0 0
    %818 = vmatpush1.bf16.msra.mxu0 %v810
    %819 = vmatprep.subr.bf16.mxu0 0
    %820 = vmatpush1.bf16.msra.mxu0 %v811
    %821 = vmatprep.subr.bf16.mxu0 0
    %822 = vmatpush1.bf16.msra.mxu0 0
    %823 = vmatprep.subr.bf16.mxu0 0
    %824 = vmatpush1.bf16.msra.mxu0 0
    %825 = vmatprep.subr.bf16.mxu0 0
    %826 = vmatpush1.bf16.msra.mxu0 0
    %827 = vmatprep.subr.bf16.mxu0 0
    %828 = vmatpush1.bf16.msra.mxu0 0
    %829 = vmatprep.subr.bf16.mxu0 0
    %830 = vmatpush1.bf16.msra.mxu0 0
    %831 = vmatprep.subr.bf16.mxu0 0
    %832 = vmatpush1.bf16.msra.mxu0 0
    %833 = vmatprep.subr.bf16.mxu0 0
    %834 = vmatpush1.bf16.msra.mxu0 0
    %835 = vmatprep.subr.bf16.mxu0 0
    %836 = vmatpush1.bf16.msra.mxu0 0
    %837 = vmatprep.subr.bf16.mxu0 0
    %838 = vmatpush1.bf16.msra.mxu0 0
    %839 = vmatprep.subr.bf16.mxu0 0
    %840 = vmatpush1.bf16.msra.mxu0 0
    %841 = vmatprep.subr.bf16.mxu0 0
    %842 = vmatpush1.bf16.msra.mxu0 0
    %843 = vmatprep.subr.bf16.mxu0 0
    %844 = vmatpush1.bf16.msra.mxu0 0
    %845 = vmatprep.subr.bf16.mxu0 0
    %846 = vmatpush1.bf16.msra.mxu0 0
    %847 = vmatprep.subr.bf16.mxu0 0
    %848 = vmatpush1.bf16.msra.mxu0 0
    %849 = vmatprep.mubr.bf16.mxu0 0
    %850 = vmatmul.mubr.bf16.gmra.mrb[0].mxu0 %v815
    %v851 = vpop.f32.mrb[0].mxu0
    %v852 = vadd.f32 %v798, %v851
    %v853 = vpop.f32.mrb[0].mxu0
    %v854 = vpop.f32.mrb[0].mxu0
    %v855 = vadd.f32 %v798, %v854
    %v856 = vpop.f32.mrb[0].mxu0
    %857 = vdwg.mxu0
    %v858 = vlaneseq
    %v859 = vshrl.u32 %v858, 7
    %v860 = vsub.s32 1, %v859
    %v861 = vrot.slane %v794, %v860
    %v866 = vunpack.c.l.b16 %v56
    %v867 = vunpack.c.l.b16 %v57
    %v868 = vunpack.c.l.b16 %v58
    %v869 = vunpack.c.l.b16 %v59
    %v870 = vpack.c.b16 %v867, %v866
    %v871 = vpack.c.b16 %v869, %v868
    %874 = vmatprep.subr.bf16.mxu0 0
    %875 = vmatpush1.bf16.msra.mxu0 %v870
    %876 = vmatprep.subr.bf16.mxu0 0
    %877 = vmatpush1.bf16.msra.mxu0 %v871
    %878 = vmatprep.subr.bf16.mxu0 0
    %879 = vmatpush1.bf16.msra.mxu0 0
    %880 = vmatprep.subr.bf16.mxu0 0
    %881 = vmatpush1.bf16.msra.mxu0 0
    %882 = vmatprep.subr.bf16.mxu0 0
    %883 = vmatpush1.bf16.msra.mxu0 0
    %884 = vmatprep.subr.bf16.mxu0 0
    %885 = vmatpush1.bf16.msra.mxu0 0
    %886 = vmatprep.subr.bf16.mxu0 0
    %887 = vmatpush1.bf16.msra.mxu0 0
    %888 = vmatprep.subr.bf16.mxu0 0
    %889 = vmatpush1.bf16.msra.mxu0 0
    %890 = vmatprep.subr.bf16.mxu0 0
    %891 = vmatpush1.bf16.msra.mxu0 0
    %892 = vmatprep.subr.bf16.mxu0 0
    %893 = vmatpush1.bf16.msra.mxu0 0
    %894 = vmatprep.subr.bf16.mxu0 0
    %895 = vmatpush1.bf16.msra.mxu0 0
    %896 = vmatprep.subr.bf16.mxu0 0
    %897 = vmatpush1.bf16.msra.mxu0 0
    %898 = vmatprep.subr.bf16.mxu0 0
    %899 = vmatpush1.bf16.msra.mxu0 0
    %900 = vmatprep.subr.bf16.mxu0 0
    %901 = vmatpush1.bf16.msra.mxu0 0
    %902 = vmatprep.subr.bf16.mxu0 0
    %903 = vmatpush1.bf16.msra.mxu0 0
    %904 = vmatprep.subr.bf16.mxu0 0
    %905 = vmatpush1.bf16.msra.mxu0 0
    %906 = vmatprep.mubr.bf16.mxu0 0
    %907 = vmatmul.mubr.bf16.gmra.mrb[0].mxu0 %v153
    %v908 = vpop.f32.mrb[0].mxu0
    %v909 = vadd.f32 %v861, %v908
    %v910 = vpop.f32.mrb[0].mxu0
    %v911 = vpop.f32.mrb[0].mxu0
    %v912 = vpop.f32.mrb[0].mxu0
    %913 = vdwg.mxu0
    %v914 = vadd.f32 %v852, %v909
    %v915 = vxor.u32 %v914, 2147483648
    %v916 = vmul.f32 %v915, 1.442695
    %v917 = vpow.pop %v916
    %v918 = vadd.f32 %v917, 1.0
    %v919 = vrcp.pop %v918
    %v920 = vmul.f32 1.0, %v919
    %922 = vrot.lane.b32.xlu0 %v909, 64
    %v923 = vpop.permute.xlu0 %922
    %v925 = vmul.f32 %v920, %v923
    %927 = vrot.lane.b32.xlu0 %v925, 64
    %v928 = vpop.permute.xlu0 %927
    %v930 = vadd.f32 %v852, %v928
    %v931 = vtanh.pop %v930
    %v932 = vsub.f32 1.0, %v920
    %934 = vrot.lane.b32.xlu0 %v931, 96
    %v935 = vpop.permute.xlu0 %934
    %v937 = vmul.f32 %v932, %v935
    %v938 = vmul.f32 %v920, 0.0
    %v939 = vadd.f32 %v937, %v938
    %v940 = vpack.c.bf16 %v939, %v939
    %942 = vrot.lane.b32.xlu0 %v940, 96
    %v943 = vpop.permute.xlu0 %942
    %v945 = vsel %vm88, %v943, 0
    %947 = vmatprep.subr.bf16.mxu0 0
    %948 = vmatpush1.bf16.msra.mxu0 %v870
    %949 = vmatprep.subr.bf16.mxu0 0
    %950 = vmatpush1.bf16.msra.mxu0 %v871
    %951 = vmatprep.subr.bf16.mxu0 0
    %952 = vmatpush1.bf16.msra.mxu0 0
    %953 = vmatprep.subr.bf16.mxu0 0
    %954 = vmatpush1.bf16.msra.mxu0 0
    %955 = vmatprep.subr.bf16.mxu0 0
    %956 = vmatpush1.bf16.msra.mxu0 0
    %957 = vmatprep.subr.bf16.mxu0 0
    %958 = vmatpush1.bf16.msra.mxu0 0
    %959 = vmatprep.subr.bf16.mxu0 0
    %960 = vmatpush1.bf16.msra.mxu0 0
    %961 = vmatprep.subr.bf16.mxu0 0
    %962 = vmatpush1.bf16.msra.mxu0 0
    %963 = vmatprep.subr.bf16.mxu0 0
    %964 = vmatpush1.bf16.msra.mxu0 0
    %965 = vmatprep.subr.bf16.mxu0 0
    %966 = vmatpush1.bf16.msra.mxu0 0
    %967 = vmatprep.subr.bf16.mxu0 0
    %968 = vmatpush1.bf16.msra.mxu0 0
    %969 = vmatprep.subr.bf16.mxu0 0
    %970 = vmatpush1.bf16.msra.mxu0 0
    %971 = vmatprep.subr.bf16.mxu0 0
    %972 = vmatpush1.bf16.msra.mxu0 0
    %973 = vmatprep.subr.bf16.mxu0 0
    %974 = vmatpush1.bf16.msra.mxu0 0
    %975 = vmatprep.subr.bf16.mxu0 0
    %976 = vmatpush1.bf16.msra.mxu0 0
    %977 = vmatprep.subr.bf16.mxu0 0
    %978 = vmatpush1.bf16.msra.mxu0 0
    %979 = vmatprep.mubr.bf16.mxu0 0
    %980 = vmatmul.mubr.bf16.gmra.mrb[0].mxu0 %v945
    %v981 = vpop.f32.mrb[0].mxu0
    %v982 = vadd.f32 %v861, %v981
    %v983 = vpop.f32.mrb[0].mxu0
    %v984 = vpop.f32.mrb[0].mxu0
    %v985 = vpop.f32.mrb[0].mxu0
    %986 = vdwg.mxu0
    %v988 = vrot.slane %v982, 6
    %v990 = vadd.f32 %v852, %v988
    %v991 = vxor.u32 %v990, 2147483648
    %v992 = vmul.f32 %v991, 1.442695
    %v993 = vpow.pop %v992
    %v994 = vadd.f32 %v993, 1.0
    %v995 = vrcp.pop %v994
    %v996 = vmul.f32 1.0, %v995
    %997 = vrot.lane.b32.xlu0 %v988, 64
    %v998 = vpop.permute.xlu0 %997
    %v1000 = vmul.f32 %v996, %v998
    %1002 = vrot.lane.b32.xlu0 %v1000, 64
    %v1003 = vpop.permute.xlu0 %1002
    %v1005 = vadd.f32 %v852, %v1003
    %v1006 = vtanh.pop %v1005
    %v1007 = vsub.f32 1.0, %v996
    %1009 = vrot.lane.b32.xlu0 %v1006, 96
    %v1010 = vpop.permute.xlu0 %1009
    %v1012 = vmul.f32 %v1007, %v1010
    %v1014 = vrot.slane %v939, 6
    %v1016 = vmul.f32 %v996, %v1014
    %v1017 = vadd.f32 %v1012, %v1016
    %v1018 = vpack.c.bf16 %v1017, %v1017
    %v1020 = vrot.slane %v1018, 1
    %1021 = vrot.lane.b32.xlu0 %v1020, 96
    %v1022 = vpop.permute.xlu0 %1021
    %v1024 = vsel %vm88, %v1022, 0
    %1026 = vmatprep.subr.bf16.mxu0 0
    %1027 = vmatpush1.bf16.msra.mxu0 %v870
    %1028 = vmatprep.subr.bf16.mxu0 0
    %1029 = vmatpush1.bf16.msra.mxu0 %v871
    %1030 = vmatprep.subr.bf16.mxu0 0
    %1031 = vmatpush1.bf16.msra.mxu0 0
    %1032 = vmatprep.subr.bf16.mxu0 0
    %1033 = vmatpush1.bf16.msra.mxu0 0
    %1034 = vmatprep.subr.bf16.mxu0 0
    %1035 = vmatpush1.bf16.msra.mxu0 0
    %1036 = vmatprep.subr.bf16.mxu0 0
    %1037 = vmatpush1.bf16.msra.mxu0 0
    %1038 = vmatprep.subr.bf16.mxu0 0
    %1039 = vmatpush1.bf16.msra.mxu0 0
    %1040 = vmatprep.subr.bf16.mxu0 0
    %1041 = vmatpush1.bf16.msra.mxu0 0
    %1042 = vmatprep.subr.bf16.mxu0 0
    %1043 = vmatpush1.bf16.msra.mxu0 0
    %1044 = vmatprep.subr.bf16.mxu0 0
    %1045 = vmatpush1.bf16.msra.mxu0 0
    %1046 = vmatprep.subr.bf16.mxu0 0
    %1047 = vmatpush1.bf16.msra.mxu0 0
    %1048 = vmatprep.subr.bf16.mxu0 0
    %1049 = vmatpush1.bf16.msra.mxu0 0
    %1050 = vmatprep.subr.bf16.mxu0 0
    %1051 = vmatpush1.bf16.msra.mxu0 0
    %1052 = vmatprep.subr.bf16.mxu0 0
    %1053 = vmatpush1.bf16.msra.mxu0 0
    %1054 = vmatprep.subr.bf16.mxu0 0
    %1055 = vmatpush1.bf16.msra.mxu0 0
    %1056 = vmatprep.subr.bf16.mxu0 0
    %1057 = vmatpush1.bf16.msra.mxu0 0
    %1058 = vmatprep.mubr.bf16.mxu0 0
    %1059 = vmatmul.mubr.bf16.gmra.mrb[0].mxu0 %v1024
    %v1060 = vpop.f32.mrb[0].mxu0
    %v1061 = vadd.f32 %v861, %v1060
    %v1062 = vpop.f32.mrb[0].mxu0
    %v1063 = vpop.f32.mrb[0].mxu0
    %v1064 = vpop.f32.mrb[0].mxu0
    %1065 = vdwg.mxu0
    %v1067 = vrot.slane %v1061, 4
    %v1069 = vadd.f32 %v852, %v1067
    %v1070 = vxor.u32 %v1069, 2147483648
    %v1071 = vmul.f32 %v1070, 1.442695
    %v1072 = vpow.pop %v1071
    %v1073 = vadd.f32 %v1072, 1.0
    %v1074 = vrcp.pop %v1073
    %v1075 = vmul.f32 1.0, %v1074
    %1076 = vrot.lane.b32.xlu0 %v1067, 64
    %v1077 = vpop.permute.xlu0 %1076
    %v1079 = vmul.f32 %v1075, %v1077
    %1081 = vrot.lane.b32.xlu0 %v1079, 64
    %v1082 = vpop.permute.xlu0 %1081
    %v1084 = vadd.f32 %v852, %v1082
    %v1085 = vtanh.pop %v1084
    %v1086 = vsub.f32 1.0, %v1075
    %1088 = vrot.lane.b32.xlu0 %v1085, 96
    %v1089 = vpop.permute.xlu0 %1088
    %v1091 = vmul.f32 %v1086, %v1089
    %v1093 = vrot.slane %v1017, 6
    %v1095 = vmul.f32 %v1075, %v1093
    %v1096 = vadd.f32 %v1091, %v1095
    %v1097 = vpack.c.bf16 %v1096, %v1096
    %v1099 = vrot.slane %v1097, 2
    %1100 = vrot.lane.b32.xlu0 %v1099, 96
    %v1101 = vpop.permute.xlu0 %1100
    %v1103 = vsel %vm88, %v1101, 0
    %1105 = vmatprep.subr.bf16.mxu0 0
    %1106 = vmatpush1.bf16.msra.mxu0 %v870
    %1107 = vmatprep.subr.bf16.mxu0 0
    %1108 = vmatpush1.bf16.msra.mxu0 %v871
    %1109 = vmatprep.subr.bf16.mxu0 0
    %1110 = vmatpush1.bf16.msra.mxu0 0
    %1111 = vmatprep.subr.bf16.mxu0 0
    %1112 = vmatpush1.bf16.msra.mxu0 0
    %1113 = vmatprep.subr.bf16.mxu0 0
    %1114 = vmatpush1.bf16.msra.mxu0 0
    %1115 = vmatprep.subr.bf16.mxu0 0
    %1116 = vmatpush1.bf16.msra.mxu0 0
    %1117 = vmatprep.subr.bf16.mxu0 0
    %1118 = vmatpush1.bf16.msra.mxu0 0
    %1119 = vmatprep.subr.bf16.mxu0 0
    %1120 = vmatpush1.bf16.msra.mxu0 0
    %1121 = vmatprep.subr.bf16.mxu0 0
    %1122 = vmatpush1.bf16.msra.mxu0 0
    %1123 = vmatprep.subr.bf16.mxu0 0
    %1124 = vmatpush1.bf16.msra.mxu0 0
    %1125 = vmatprep.subr.bf16.mxu0 0
    %1126 = vmatpush1.bf16.msra.mxu0 0
    %1127 = vmatprep.subr.bf16.mxu0 0
    %1128 = vmatpush1.bf16.msra.mxu0 0
    %1129 = vmatprep.subr.bf16.mxu0 0
    %1130 = vmatpush1.bf16.msra.mxu0 0
    %1131 = vmatprep.subr.bf16.mxu0 0
    %1132 = vmatpush1.bf16.msra.mxu0 0
    %1133 = vmatprep.subr.bf16.mxu0 0
    %1134 = vmatpush1.bf16.msra.mxu0 0
    %1135 = vmatprep.subr.bf16.mxu0 0
    %1136 = vmatpush1.bf16.msra.mxu0 0
    %1137 = vmatprep.mubr.bf16.mxu0 0
    %1138 = vmatmul.mubr.bf16.gmra.mrb[0].mxu0 %v1103
    %v1139 = vpop.f32.mrb[0].mxu0
    %v1140 = vadd.f32 %v861, %v1139
    %v1141 = vpop.f32.mrb[0].mxu0
    %v1142 = vpop.f32.mrb[0].mxu0
    %v1143 = vpop.f32.mrb[0].mxu0
    %1144 = vdwg.mxu0
    %v1146 = vrot.slane %v1140, 2
    %v1148 = vadd.f32 %v852, %v1146
    %v1149 = vxor.u32 %v1148, 2147483648
    %v1150 = vmul.f32 %v1149, 1.442695
    %v1151 = vpow.pop %v1150
    %v1152 = vadd.f32 %v1151, 1.0
    %v1153 = vrcp.pop %v1152
    %v1154 = vmul.f32 1.0, %v1153
    %1155 = vrot.lane.b32.xlu0 %v1146, 64
    %v1156 = vpop.permute.xlu0 %1155
    %v1158 = vmul.f32 %v1154, %v1156
    %1160 = vrot.lane.b32.xlu0 %v1158, 64
    %v1161 = vpop.permute.xlu0 %1160
    %v1163 = vadd.f32 %v852, %v1161
    %v1164 = vtanh.pop %v1163
    %v1165 = vsub.f32 1.0, %v1154
    %1167 = vrot.lane.b32.xlu0 %v1164, 96
    %v1168 = vpop.permute.xlu0 %1167
    %v1170 = vmul.f32 %v1165, %v1168
    %v1172 = vrot.slane %v1096, 6
    %v1174 = vmul.f32 %v1154, %v1172
    %v1175 = vadd.f32 %v1170, %v1174
    %v1176 = vpack.c.bf16 %v1175, %v1175
    %v1178 = vrot.slane %v1176, 3
    %1179 = vrot.lane.b32.xlu0 %v1178, 96
    %v1180 = vpop.permute.xlu0 %1179
    %v1182 = vsel %vm88, %v1180, 0
    %1184 = vmatprep.subr.bf16.mxu0 0
    %1185 = vmatpush1.bf16.msra.mxu0 %v870
    %1186 = vmatprep.subr.bf16.mxu0 0
    %1187 = vmatpush1.bf16.msra.mxu0 %v871
    %1188 = vmatprep.subr.bf16.mxu0 0
    %1189 = vmatpush1.bf16.msra.mxu0 0
    %1190 = vmatprep.subr.bf16.mxu0 0
    %1191 = vmatpush1.bf16.msra.mxu0 0
    %1192 = vmatprep.subr.bf16.mxu0 0
    %1193 = vmatpush1.bf16.msra.mxu0 0
    %1194 = vmatprep.subr.bf16.mxu0 0
    %1195 = vmatpush1.bf16.msra.mxu0 0
    %1196 = vmatprep.subr.bf16.mxu0 0
    %1197 = vmatpush1.bf16.msra.mxu0 0
    %1198 = vmatprep.subr.bf16.mxu0 0
    %1199 = vmatpush1.bf16.msra.mxu0 0
    %1200 = vmatprep.subr.bf16.mxu0 0
    %1201 = vmatpush1.bf16.msra.mxu0 0
    %1202 = vmatprep.subr.bf16.mxu0 0
    %1203 = vmatpush1.bf16.msra.mxu0 0
    %1204 = vmatprep.subr.bf16.mxu0 0
    %1205 = vmatpush1.bf16.msra.mxu0 0
    %1206 = vmatprep.subr.bf16.mxu0 0
    %1207 = vmatpush1.bf16.msra.mxu0 0
    %1208 = vmatprep.subr.bf16.mxu0 0
    %1209 = vmatpush1.bf16.msra.mxu0 0
    %1210 = vmatprep.subr.bf16.mxu0 0
    %1211 = vmatpush1.bf16.msra.mxu0 0
    %1212 = vmatprep.subr.bf16.mxu0 0
    %1213 = vmatpush1.bf16.msra.mxu0 0
    %1214 = vmatprep.subr.bf16.mxu0 0
    %1215 = vmatpush1.bf16.msra.mxu0 0
    %1216 = vmatprep.mubr.bf16.mxu0 0
    %1217 = vmatmul.mubr.bf16.gmra.mrb[0].mxu0 %v1182
    %v1218 = vpop.f32.mrb[0].mxu0
    %v1219 = vadd.f32 %v861, %v1218
    %v1220 = vpop.f32.mrb[0].mxu0
    %v1221 = vpop.f32.mrb[0].mxu0
    %v1222 = vpop.f32.mrb[0].mxu0
    %1223 = vdwg.mxu0
    %v1224 = vadd.f32 %v855, %v1219
    %v1225 = vxor.u32 %v1224, 2147483648
    %v1226 = vmul.f32 %v1225, 1.442695
    %v1227 = vpow.pop %v1226
    %v1228 = vadd.f32 %v1227, 1.0
    %v1229 = vrcp.pop %v1228
    %v1230 = vmul.f32 1.0, %v1229
    %1232 = vrot.lane.b32.xlu0 %v1219, 64
    %v1233 = vpop.permute.xlu0 %1232
    %v1235 = vmul.f32 %v1230, %v1233
    %1237 = vrot.lane.b32.xlu0 %v1235, 64
    %v1238 = vpop.permute.xlu0 %1237
    %v1240 = vadd.f32 %v855, %v1238
    %v1241 = vtanh.pop %v1240
    %v1242 = vsub.f32 1.0, %v1230
    %1244 = vrot.lane.b32.xlu0 %v1241, 96
    %v1245 = vpop.permute.xlu0 %1244
    %v1247 = vmul.f32 %v1242, %v1245
    %v1249 = vrot.slane %v1175, 6
    %v1251 = vmul.f32 %v1230, %v1249
    %v1252 = vadd.f32 %v1247, %v1251
    %v1253 = vpack.c.bf16 %v1252, %v1252
    %1255 = vrot.lane.b32.xlu0 %v1253, 96
    %v1256 = vpop.permute.xlu0 %1255
    %v1258 = vsel %vm88, %v1256, 0
    %1260 = vmatprep.subr.bf16.mxu0 0
    %1261 = vmatpush1.bf16.msra.mxu0 %v870
    %1262 = vmatprep.subr.bf16.mxu0 0
    %1263 = vmatpush1.bf16.msra.mxu0 %v871
    %1264 = vmatprep.subr.bf16.mxu0 0
    %1265 = vmatpush1.bf16.msra.mxu0 0
    %1266 = vmatprep.subr.bf16.mxu0 0
    %1267 = vmatpush1.bf16.msra.mxu0 0
    %1268 = vmatprep.subr.bf16.mxu0 0
    %1269 = vmatpush1.bf16.msra.mxu0 0
    %1270 = vmatprep.subr.bf16.mxu0 0
    %1271 = vmatpush1.bf16.msra.mxu0 0
    %1272 = vmatprep.subr.bf16.mxu0 0
    %1273 = vmatpush1.bf16.msra.mxu0 0
    %1274 = vmatprep.subr.bf16.mxu0 0
    %1275 = vmatpush1.bf16.msra.mxu0 0
    %1276 = vmatprep.subr.bf16.mxu0 0
    %1277 = vmatpush1.bf16.msra.mxu0 0
    %1278 = vmatprep.subr.bf16.mxu0 0
    %1279 = vmatpush1.bf16.msra.mxu0 0
    %1280 = vmatprep.subr.bf16.mxu0 0
    %1281 = vmatpush1.bf16.msra.mxu0 0
    %1282 = vmatprep.subr.bf16.mxu0 0
    %1283 = vmatpush1.bf16.msra.mxu0 0
    %1284 = vmatprep.subr.bf16.mxu0 0
    %1285 = vmatpush1.bf16.msra.mxu0 0
    %1286 = vmatprep.subr.bf16.mxu0 0
    %1287 = vmatpush1.bf16.msra.mxu0 0
    %1288 = vmatprep.subr.bf16.mxu0 0
    %1289 = vmatpush1.bf16.msra.mxu0 0
    %1290 = vmatprep.subr.bf16.mxu0 0
    %1291 = vmatpush1.bf16.msra.mxu0 0
    %1292 = vmatprep.mubr.bf16.mxu0 0
    %1293 = vmatmul.mubr.bf16.gmra.mrb[0].mxu0 %v1258
    %v1294 = vpop.f32.mrb[0].mxu0
    %v1295 = vadd.f32 %v861, %v1294
    %v1296 = vpop.f32.mrb[0].mxu0
    %v1297 = vpop.f32.mrb[0].mxu0
    %v1298 = vpop.f32.mrb[0].mxu0
    %1299 = vdwg.mxu0
    %v1301 = vrot.slane %v1295, 6
    %v1303 = vadd.f32 %v855, %v1301
    %v1304 = vxor.u32 %v1303, 2147483648
    %v1305 = vmul.f32 %v1304, 1.442695
    %v1306 = vpow.pop %v1305
    %v1307 = vadd.f32 %v1306, 1.0
    %v1308 = vrcp.pop %v1307
    %v1309 = vmul.f32 1.0, %v1308
    %1310 = vrot.lane.b32.xlu0 %v1301, 64
    %v1311 = vpop.permute.xlu0 %1310
    %v1313 = vmul.f32 %v1309, %v1311
    %1315 = vrot.lane.b32.xlu0 %v1313, 64
    %v1316 = vpop.permute.xlu0 %1315
    %v1318 = vadd.f32 %v855, %v1316
    %v1319 = vtanh.pop %v1318
    %v1320 = vsub.f32 1.0, %v1309
    %1322 = vrot.lane.b32.xlu0 %v1319, 96
    %v1323 = vpop.permute.xlu0 %1322
    %v1325 = vmul.f32 %v1320, %v1323
    %v1327 = vrot.slane %v1252, 6
    %v1329 = vmul.f32 %v1309, %v1327
    %v1330 = vadd.f32 %v1325, %v1329
    %v1331 = vpack.c.bf16 %v1330, %v1330
    %v1333 = vrot.slane %v1331, 1
    %1334 = vrot.lane.b32.xlu0 %v1333, 96
    %v1335 = vpop.permute.xlu0 %1334
    %v1337 = vsel %vm88, %v1335, 0
    %1339 = vmatprep.subr.bf16.mxu0 0
    %1340 = vmatpush1.bf16.msra.mxu0 %v870
    %1341 = vmatprep.subr.bf16.mxu0 0
    %1342 = vmatpush1.bf16.msra.mxu0 %v871
    %1343 = vmatprep.subr.bf16.mxu0 0
    %1344 = vmatpush1.bf16.msra.mxu0 0
    %1345 = vmatprep.subr.bf16.mxu0 0
    %1346 = vmatpush1.bf16.msra.mxu0 0
    %1347 = vmatprep.subr.bf16.mxu0 0
    %1348 = vmatpush1.bf16.msra.mxu0 0
    %1349 = vmatprep.subr.bf16.mxu0 0
    %1350 = vmatpush1.bf16.msra.mxu0 0
    %1351 = vmatprep.subr.bf16.mxu0 0
    %1352 = vmatpush1.bf16.msra.mxu0 0
    %1353 = vmatprep.subr.bf16.mxu0 0
    %1354 = vmatpush1.bf16.msra.mxu0 0
    %1355 = vmatprep.subr.bf16.mxu0 0
    %1356 = vmatpush1.bf16.msra.mxu0 0
    %1357 = vmatprep.subr.bf16.mxu0 0
    %1358 = vmatpush1.bf16.msra.mxu0 0
    %1359 = vmatprep.subr.bf16.mxu0 0
    %1360 = vmatpush1.bf16.msra.mxu0 0
    %1361 = vmatprep.subr.bf16.mxu0 0
    %1362 = vmatpush1.bf16.msra.mxu0 0
    %1363 = vmatprep.subr.bf16.mxu0 0
    %1364 = vmatpush1.bf16.msra.mxu0 0
    %1365 = vmatprep.subr.bf16.mxu0 0
    %1366 = vmatpush1.bf16.msra.mxu0 0
    %1367 = vmatprep.subr.bf16.mxu0 0
    %1368 = vmatpush1.bf16.msra.mxu0 0
    %1369 = vmatprep.subr.bf16.mxu0 0
    %1370 = vmatpush1.bf16.msra.mxu0 0
    %1371 = vmatprep.mubr.bf16.mxu0 0
    %1372 = vmatmul.mubr.bf16.gmra.mrb[0].mxu0 %v1337
    %v1373 = vpop.f32.mrb[0].mxu0
    %v1374 = vadd.f32 %v861, %v1373
    %v1375 = vpop.f32.mrb[0].mxu0
    %v1376 = vpop.f32.mrb[0].mxu0
    %v1377 = vpop.f32.mrb[0].mxu0
    %1378 = vdwg.mxu0
    %v1380 = vrot.slane %v1374, 4
    %v1382 = vadd.f32 %v855, %v1380
    %v1383 = vxor.u32 %v1382, 2147483648
    %v1384 = vmul.f32 %v1383, 1.442695
    %v1385 = vpow.pop %v1384
    %v1386 = vadd.f32 %v1385, 1.0
    %v1387 = vrcp.pop %v1386
    %v1388 = vmul.f32 1.0, %v1387
    %1389 = vrot.lane.b32.xlu0 %v1380, 64
    %v1390 = vpop.permute.xlu0 %1389
    %v1392 = vmul.f32 %v1388, %v1390
    %1394 = vrot.lane.b32.xlu0 %v1392, 64
    %v1395 = vpop.permute.xlu0 %1394
    %v1397 = vadd.f32 %v855, %v1395
    %v1398 = vtanh.pop %v1397
    %v1399 = vsub.f32 1.0, %v1388
    %1401 = vrot.lane.b32.xlu0 %v1398, 96
    %v1402 = vpop.permute.xlu0 %1401
    %v1404 = vmul.f32 %v1399, %v1402
    %v1406 = vrot.slane %v1330, 6
    %v1408 = vmul.f32 %v1388, %v1406
    %v1409 = vadd.f32 %v1404, %v1408
    %v1410 = vpack.c.bf16 %v1409, %v1409
    %v1412 = vrot.slane %v1410, 2
    %1413 = vrot.lane.b32.xlu0 %v1412, 96
    %v1414 = vpop.permute.xlu0 %1413
    %v1416 = vsel %vm88, %v1414, 0
    %1418 = vmatprep.subr.bf16.mxu0 0
    %1419 = vmatpush1.bf16.msra.mxu0 %v870
    %1420 = vmatprep.subr.bf16.mxu0 0
    %1421 = vmatpush1.bf16.msra.mxu0 %v871
    %1422 = vmatprep.subr.bf16.mxu0 0
    %1423 = vmatpush1.bf16.msra.mxu0 0
    %1424 = vmatprep.subr.bf16.mxu0 0
    %1425 = vmatpush1.bf16.msra.mxu0 0
    %1426 = vmatprep.subr.bf16.mxu0 0
    %1427 = vmatpush1.bf16.msra.mxu0 0
    %1428 = vmatprep.subr.bf16.mxu0 0
    %1429 = vmatpush1.bf16.msra.mxu0 0
    %1430 = vmatprep.subr.bf16.mxu0 0
    %1431 = vmatpush1.bf16.msra.mxu0 0
    %1432 = vmatprep.subr.bf16.mxu0 0
    %1433 = vmatpush1.bf16.msra.mxu0 0
    %1434 = vmatprep.subr.bf16.mxu0 0
    %1435 = vmatpush1.bf16.msra.mxu0 0
    %1436 = vmatprep.subr.bf16.mxu0 0
    %1437 = vmatpush1.bf16.msra.mxu0 0
    %1438 = vmatprep.subr.bf16.mxu0 0
    %1439 = vmatpush1.bf16.msra.mxu0 0
    %1440 = vmatprep.subr.bf16.mxu0 0
    %1441 = vmatpush1.bf16.msra.mxu0 0
    %1442 = vmatprep.subr.bf16.mxu0 0
    %1443 = vmatpush1.bf16.msra.mxu0 0
    %1444 = vmatprep.subr.bf16.mxu0 0
    %1445 = vmatpush1.bf16.msra.mxu0 0
    %1446 = vmatprep.subr.bf16.mxu0 0
    %1447 = vmatpush1.bf16.msra.mxu0 0
    %1448 = vmatprep.subr.bf16.mxu0 0
    %1449 = vmatpush1.bf16.msra.mxu0 0
    %1450 = vmatprep.mubr.bf16.mxu0 0
    %1451 = vmatmul.mubr.bf16.gmra.mrb[0].mxu0 %v1416
    %v1452 = vpop.f32.mrb[0].mxu0
    %v1453 = vadd.f32 %v861, %v1452
    %v1454 = vpop.f32.mrb[0].mxu0
    %v1455 = vpop.f32.mrb[0].mxu0
    %v1456 = vpop.f32.mrb[0].mxu0
    %1457 = vdwg.mxu0
    %v1459 = vrot.slane %v1453, 2
    %v1461 = vadd.f32 %v855, %v1459
    %v1462 = vxor.u32 %v1461, 2147483648
    %v1463 = vmul.f32 %v1462, 1.442695
    %v1464 = vpow.pop %v1463
    %v1465 = vadd.f32 %v1464, 1.0
    %v1466 = vrcp.pop %v1465
    %v1467 = vmul.f32 1.0, %v1466
    %1468 = vrot.lane.b32.xlu0 %v1459, 64
    %v1469 = vpop.permute.xlu0 %1468
    %v1471 = vmul.f32 %v1467, %v1469
    %1473 = vrot.lane.b32.xlu0 %v1471, 64
    %v1474 = vpop.permute.xlu0 %1473
    %v1476 = vadd.f32 %v855, %v1474
    %v1477 = vtanh.pop %v1476
    %v1478 = vsub.f32 1.0, %v1467
    %1480 = vrot.lane.b32.xlu0 %v1477, 96
    %v1481 = vpop.permute.xlu0 %1480
    %v1483 = vmul.f32 %v1478, %v1481
    %v1485 = vrot.slane %v1409, 6
    %v1487 = vmul.f32 %v1467, %v1485
    %v1488 = vadd.f32 %v1483, %v1487
    %v1489 = vpack.c.bf16 %v1488, %v1488
    %v1490 = vunpack.c.l.bf16 %v65
    %v1491 = vlaneseq
    %v1492 = vshrl.u32 %v1491, 7
    %v1493 = vsub.s32 0, %v1492
    %v1494 = vrot.slane %v1490, %v1493
    %v1496 = vrot.slane %v1489, 3
    %1497 = vrot.lane.b32.xlu0 %v1496, 96
    %v1498 = vpop.permute.xlu0 %1497
    %v1503 = vunpack.c.l.b16 %v61
    %v1504 = vunpack.c.l.b16 %v62
    %v1505 = vunpack.c.l.b16 %v63
    %v1506 = vunpack.c.l.b16 %v64
    %v1507 = vpack.c.b16 %v1504, %v1503
    %v1508 = vpack.c.b16 %v1506, %v1505
    %v1512 = vsel %vm88, %v1498, 0
    %1514 = vmatprep.subr.bf16.mxu0 0
    %1515 = vmatpush1.bf16.msra.mxu0 %v1507
    %1516 = vmatprep.subr.bf16.mxu0 0
    %1517 = vmatpush1.bf16.msra.mxu0 %v1508
    %1518 = vmatprep.subr.bf16.mxu0 0
    %1519 = vmatpush1.bf16.msra.mxu0 0
    %1520 = vmatprep.subr.bf16.mxu0 0
    %1521 = vmatpush1.bf16.msra.mxu0 0
    %1522 = vmatprep.subr.bf16.mxu0 0
    %1523 = vmatpush1.bf16.msra.mxu0 0
    %1524 = vmatprep.subr.bf16.mxu0 0
    %1525 = vmatpush1.bf16.msra.mxu0 0
    %1526 = vmatprep.subr.bf16.mxu0 0
    %1527 = vmatpush1.bf16.msra.mxu0 0
    %1528 = vmatprep.subr.bf16.mxu0 0
    %1529 = vmatpush1.bf16.msra.mxu0 0
    %1530 = vmatprep.subr.bf16.mxu0 0
    %1531 = vmatpush1.bf16.msra.mxu0 0
    %1532 = vmatprep.subr.bf16.mxu0 0
    %1533 = vmatpush1.bf16.msra.mxu0 0
    %1534 = vmatprep.subr.bf16.mxu0 0
    %1535 = vmatpush1.bf16.msra.mxu0 0
    %1536 = vmatprep.subr.bf16.mxu0 0
    %1537 = vmatpush1.bf16.msra.mxu0 0
    %1538 = vmatprep.subr.bf16.mxu0 0
    %1539 = vmatpush1.bf16.msra.mxu0 0
    %1540 = vmatprep.subr.bf16.mxu0 0
    %1541 = vmatpush1.bf16.msra.mxu0 0
    %1542 = vmatprep.subr.bf16.mxu0 0
    %1543 = vmatpush1.bf16.msra.mxu0 0
    %1544 = vmatprep.subr.bf16.mxu0 0
    %1545 = vmatpush1.bf16.msra.mxu0 0
    %1546 = vmatprep.mubr.bf16.mxu0 0
    %1547 = vmatmul.mubr.bf16.gmra.mrb[0].mxu0 %v1512
    %v1548 = vpop.f32.mrb[0].mxu0
    %v1549 = vadd.f32 %v1494, %v1548
    %v1550 = vpop.f32.mrb[0].mxu0
    %v1551 = vpop.f32.mrb[0].mxu0
    %v1552 = vpop.f32.mrb[0].mxu0
    %1553 = vdwg.mxu0
    %vm1554 = vcmask 74752
    %1555 = vst.msk [vmem:[#allocation7] sm:$0x3] %vm1554, %v1549
    // Predicated region
    $region18: #{my_gru_forward.1} parent=1 // pred_check
      _
    $region19: #{my_gru_forward.1} parent=1 // pred_check_branch
      %1557 = sbr.rel (0) target = $region21
    $region20: #{my_gru_forward.1} parent=1 // pred_region
      %s1559 = ssub.s32 32, 32
      %1560 = vsyncadd [#allocation4], %s1559
      %s1562 = sshll.u32 [#allocation7], 4
      %s1563 = int_to_ptr.vmem [resolvable:$true] %s1562
      %1565 = dma.vmem_to_hbm [thread:$0]  %s1563, 32, %s2, [#allocation4]
    $region21: #{my_gru_forward.1} parent=1 // pred_fallthru
      _
    // Predicated region
    $region22: #{my_gru_forward.1} parent=1 // pred_check
      _
    $region23: #{my_gru_forward.1} parent=1 // pred_check_branch
      %1567 = sbr.rel (0) target = $region25
    $region24: #{my_gru_forward.1} parent=1 // pred_region
      %1568 = dma.done [#allocation4], 32
    $region25: #{my_gru_forward.1} parent=1 // pred_fallthru
      _
    %1569 = vsyncpa [#allocation3], 1
    %1570 = vsyncpa [#allocation6], 1
    %1571 = vsyncpa [#allocation4], 1

</llo_original>
